<compile_context>
chip_gen: v7x
topology: tpu7x:2x2x1
jax: 0.10.0
libtpu: 0.0.40
codegen_flags: <defaults>
</compile_context>

<pallas_src>
import functools

import jax
import jax.numpy as jnp
import numpy as np
from jax.experimental import pallas as pl
from jax.experimental.pallas import tpu as pltpu

_LN_EPS = 1e-5


def _round_up(n, m):
    return ((n + m - 1) // m) * m


def _layernorm(x, gamma, beta):
    # var = E[x^2] - E[x]^2: one fewer elementwise pass than E[(x-mu)^2].
    mu = jnp.mean(x, axis=-1, keepdims=True)
    var = jnp.maximum(jnp.mean(x * x, axis=-1, keepdims=True) - mu * mu, 0.0)
    return (x - mu) * jax.lax.rsqrt(var + _LN_EPS) * gamma + beta


def _gelu_exact(x):
    # nn.GELU() default = exact erf formulation (PyTorch parity).
    return 0.5 * x * (1.0 + jax.lax.erf(x * (1.0 / np.sqrt(2.0))))


def _gelu_tanh(x):
    # nn.GELU(approximate='tanh'): transcendental goes to the EUP instead of a
    # long VALU erf polynomial (flag-selectable; numerics differ slightly).
    c = 0.7978845608028654  # sqrt(2/pi)
    return 0.5 * x * (1.0 + jnp.tanh(c * (x + 0.044715 * x * x * x)))


def _mish_kernel(x):
    # mish(x) = x * tanh(softplus(x)) = x * (1 - 2 / ((1 + e^x)^2 + 1))
    xc = jnp.minimum(x, 20.0)            # (1 + e^20)^2 ~ 2.4e17, finite in f32
    t = 1.0 + jnp.exp(xc)
    d = t * t + 1.0
    r = pl.reciprocal(d, approx=True)
    r = r * (2.0 - d * r)                # Newton step 1 (VPU only)
    r = r * (2.0 - d * r)                # Newton step 2 (VPU only, full f32 accuracy)
    y = x * (1.0 - 2.0 * r)
    # For x > 20, tanh(softplus(x)) == 1 to f32 precision, so mish(x) == x.
    return jnp.where(x > 20.0, x, y)


def _mish_ref(x):
    sp = jnp.maximum(x, 0.0) + jnp.log1p(jnp.exp(-jnp.abs(x)))
    return x * jnp.tanh(sp)


def _output_layer_kernel(fuse_branches, gelu_tanh, *refs):
    if fuse_branches:
        (x_ref, res_ref, attn_ref,
         ln_h_g_ref, ln_h_b_ref, ln_r_g_ref, ln_r_b_ref,
         w_br_ref, b_br_ref, w1_br_ref, w1_a_ref, b1_ref,
         w2_ref, b2_ref, out_ref) = refs
    else:
        (x_ref, res_ref, attn_ref,
         ln_h_g_ref, ln_h_b_ref, ln_r_g_ref, ln_r_b_ref,
         w_head_ref, b_head_ref, w_res_ref, b_res_ref,
         w1_h_ref, w1_r_ref, w1_a_ref, b1_ref,
         w2_ref, b2_ref, out_ref) = refs

    f32 = jnp.float32
    cdt = w2_ref.dtype                   # matmul dtype (bf16 default / f32 exact path)
    gelu = _gelu_tanh if gelu_tanh else _gelu_exact

    # ---- LayerNorms (always f32 math) ----
    xn = _layernorm(x_ref[...].astype(f32),
                    ln_h_g_ref[...].astype(f32), ln_h_b_ref[...].astype(f32))
    rn = _layernorm(res_ref[...].astype(f32),
                    ln_r_g_ref[...].astype(f32), ln_r_b_ref[...].astype(f32))

    if fuse_branches:
        # Both branches in ONE MXU dot: [xn | rn] @ blockdiag(w_head, w_res).
        xr = jnp.concatenate([xn, rn], axis=-1).astype(cdt)
        hr = jnp.dot(xr, w_br_ref[...], preferred_element_type=f32)
        hr = gelu(hr + b_br_ref[...].astype(f32))
        # classifier concat realized as chained accumulation of split weights.
        z = jnp.dot(hr.astype(cdt), w1_br_ref[...], preferred_element_type=f32)
        z += jnp.dot(attn_ref[...].astype(cdt), w1_a_ref[...],
                     preferred_element_type=f32)
    else:
        h = jnp.dot(xn.astype(cdt), w_head_ref[...], preferred_element_type=f32)
        h = gelu(h + b_head_ref[...].astype(f32))
        rr = jnp.dot(rn.astype(cdt), w_res_ref[...], preferred_element_type=f32)
        rr = gelu(rr + b_res_ref[...].astype(f32))
        z = jnp.dot(h.astype(cdt), w1_h_ref[...], preferred_element_type=f32)
        z += jnp.dot(rr.astype(cdt), w1_r_ref[...], preferred_element_type=f32)
        z += jnp.dot(attn_ref[...].astype(cdt), w1_a_ref[...],
                     preferred_element_type=f32)

    z = _mish_kernel(z + b1_ref[...].astype(f32))
    out = jnp.dot(z.astype(cdt), w2_ref[...], preferred_element_type=f32)
    out_ref[...] = (out + b2_ref[...].astype(f32)).astype(out_ref.dtype)


@functools.partial(
    jax.jit,
    static_argnames=("n_classes", "block_b", "compute_dtype", "gelu_approx_tanh",
                     "fuse_branches", "single_buffer_params", "core_parallel"))
def output_layer(x, residual, attn, params, n_classes, block_b=1024,
                 compute_dtype=jnp.bfloat16, gelu_approx_tanh=False,
                 fuse_branches=None, single_buffer_params=True,
                 core_parallel=False):
    B, d_in = x.shape
    m2 = attn.shape[-1]
    d_hidden = params["w_head"].shape[-1]
    r_hidden = params["w_res"].shape[-1]
    n_out = _round_up(max(n_classes, 1), 128)      # lane-dense output width
    fuse = (d_in <= 128) if fuse_branches is None else bool(fuse_branches)

    # ---- weight prep (host side, once per compile) ----
    w_head = params["w_head"].astype(compute_dtype)
    w_res = params["w_res"].astype(compute_dtype)
    w1_h = params["w1_h"].astype(compute_dtype)
    w1_r = params["w1_r"].astype(compute_dtype)
    w1_a = params["w1_a"].astype(compute_dtype)
    # Lane-dense final layer: zero-pad to n_out (=128) columns -> unmasked stores.
    w2 = jnp.pad(params["w2"].astype(compute_dtype), ((0, 0), (0, n_out - n_classes)))
    b2 = jnp.pad(params["b2"], ((0, 0), (0, n_out - n_classes)))

    if fuse:
        w_br = jnp.concatenate(
            [jnp.concatenate([w_head, jnp.zeros((d_in, r_hidden), compute_dtype)], axis=1),
             jnp.concatenate([jnp.zeros((d_in, d_hidden), compute_dtype), w_res], axis=1)],
            axis=0)
        b_br = jnp.concatenate([params["b_head"], params["b_res"]], axis=1)
        w1_br = jnp.concatenate([w1_h, w1_r], axis=0)

    # ---- streamed operands: pre-cast to compute dtype (halves DMA bytes in bf16) ----
    xs = x.astype(compute_dtype)
    rs = residual.astype(compute_dtype)
    ats = attn.astype(compute_dtype)

    # ---- batch tile from a VMEM budget (safe on v5e 16 MiB / v7x 32 MiB scoped) ----
    s_item = np.dtype(compute_dtype).itemsize
    per_row = (2 * (2 * d_in + m2) * s_item          # double-buffered input streams
               + 2 * n_out * 4                        # double-buffered f32 output
               + (4 * d_in + d_hidden + r_hidden + 128 + n_out) * 4)  # live f32 temps
    budget = 20 * 2 ** 20
    tb_cap = max(8, (budget // per_row) // 8 * 8)
    TB = min(block_b, tb_cap, _round_up(B, 8))
    if B >= 16:
        # Guarantee >= 2 grid steps when the batch allows it: real DMA/compute
        # pipelining and work for both v7x TensorCores.
        TB = min(TB, _round_up((B + 1) // 2, 8))
    TB = max(8, (TB // 8) * 8)
    B_pad = _round_up(B, TB)
    if B_pad != B:
        pad = ((0, B_pad - B), (0, 0))
        xs, rs, ats = jnp.pad(xs, pad), jnp.pad(rs, pad), jnp.pad(ats, pad)
    grid = (B_pad // TB,)

    def batch_map(i):
        return (i, 0)

    def const_map(i):
        return (0, 0)

    def stream_spec(arr):
        return pl.BlockSpec((TB, arr.shape[-1]), batch_map)

    def resident_spec(arr):
        # Whole-array block, constant index -> fetched once, held in VMEM.
        if single_buffer_params:
            # Constant block index: double-buffering would only waste VMEM.
            return pl.BlockSpec(tuple(arr.shape), const_map,
                                pipeline_mode=pl.Buffered(1))
        return pl.BlockSpec(tuple(arr.shape), const_map)

    ln_args = (params["ln_h_g"], params["ln_h_b"], params["ln_r_g"], params["ln_r_b"])
    if fuse:
        param_args = ln_args + (w_br, b_br, w1_br, w1_a, params["b1"], w2, b2)
    else:
        param_args = ln_args + (w_head, params["b_head"], w_res, params["b_res"],
                                w1_h, w1_r, w1_a, params["b1"], w2, b2)
    stream_args = (xs, rs, ats)

    in_specs = ([stream_spec(a) for a in stream_args]
                + [resident_spec(a) for a in param_args])
    out_specs = pl.BlockSpec((TB, n_out), batch_map)

    # ---- advisory cost estimate + explicit VMEM limit ----
    branch_flops = (2 * d_in * (d_hidden + r_hidden)) if fuse \
        else (d_in * d_hidden + d_in * r_hidden)
    flops = 2 * B_pad * (branch_flops + (d_hidden + r_hidden + m2) * 128 + 128 * n_out)
    transcendentals = B_pad * (d_hidden + r_hidden + 2 * 128)
    param_bytes = sum(int(np.prod(a.shape)) * a.dtype.itemsize for a in param_args)
    bytes_accessed = B_pad * (2 * d_in + m2) * s_item + B_pad * n_out * 4 + param_bytes

    resident_bufs = 1 if single_buffer_params else 2
    vmem_est = TB * per_row + resident_bufs * param_bytes
    vmem_limit = int(min(max(2 * vmem_est, 32 * 2 ** 20), 48 * 2 ** 20))

    dim_sem = (pltpu.CORE_PARALLEL if core_parallel else pltpu.PARALLEL,)
    kernel = functools.partial(_output_layer_kernel, fuse, gelu_approx_tanh)

    out = pl.pallas_call(
        kernel,
        out_shape=jax.ShapeDtypeStruct((B_pad, n_out), jnp.float32),
        grid=grid,
        in_specs=in_specs,
        out_specs=out_specs,
        compiler_params=pltpu.CompilerParams(
            dimension_semantics=dim_sem,
            vmem_limit_bytes=vmem_limit,
        ),
        cost_estimate=pl.CostEstimate(
            flops=int(flops),
            transcendentals=int(transcendentals),
            bytes_accessed=int(bytes_accessed),
        ),
    )(*stream_args, *param_args)
    return out[:B, :n_classes]


def init_params(key, d_in, d_hidden, r_hidden, n_classes, modal_num):
    m2 = modal_num ** 2
    ks = jax.random.split(key, 4)

    def lin(k, fan_in, fan_out):
        kw, kb = jax.random.split(k)
        bound = 1.0 / np.sqrt(fan_in)
        w = jax.random.uniform(kw, (fan_in, fan_out), jnp.float32, -bound, bound)
        b = jax.random.uniform(kb, (1, fan_out), jnp.float32, -bound, bound)
        return w, b

    w_head, b_head = lin(ks[0], d_in, d_hidden)
    w_res, b_res = lin(ks[1], d_in, r_hidden)
    w1, b1 = lin(ks[2], d_hidden + r_hidden + m2, 128)
    w2, b2 = lin(ks[3], 128, n_classes)

    return dict(
        ln_h_g=jnp.ones((1, d_in), jnp.float32), ln_h_b=jnp.zeros((1, d_in), jnp.float32),
        ln_r_g=jnp.ones((1, d_in), jnp.float32), ln_r_b=jnp.zeros((1, d_in), jnp.float32),
        w_head=w_head, b_head=b_head,
        w_res=w_res, b_res=b_res,
        w1_h=w1[:d_hidden], w1_r=w1[d_hidden:d_hidden + r_hidden],
        w1_a=w1[d_hidden + r_hidden:], b1=b1,
        w2=w2, b2=b2,
    )


def reference(x, residual, attn, params, gelu_tanh=False):
    gelu = _gelu_tanh if gelu_tanh else _gelu_exact
    h = gelu(_layernorm(x, params["ln_h_g"], params["ln_h_b"]) @ params["w_head"]
             + params["b_head"])
    r = gelu(_layernorm(residual, params["ln_r_g"], params["ln_r_b"]) @ params["w_res"]
             + params["b_res"])
    cat = jnp.concatenate([h, r, attn], axis=-1)
    w1 = jnp.concatenate([params["w1_h"], params["w1_r"], params["w1_a"]], axis=0)
    z = _mish_ref(cat @ w1 + params["b1"])
    return z @ params["w2"] + params["b2"]


if __name__ == "__main__":
    B, d_in, d_hidden, r_hidden = 8, 32, 64, 32
    modal_num, n_classes = 4, 8

    key = jax.random.PRNGKey(0)
    k_x, k_r, k_a, k_p = jax.random.split(key, 4)
    x = jax.random.normal(k_x, (B, d_in), jnp.float32)
    residual = jax.random.normal(k_r, (B, d_in), jnp.float32)
    attn = jax.random.normal(k_a, (B, modal_num ** 2), jnp.float32)

    params = init_params(k_p, d_in, d_hidden, r_hidden, n_classes, modal_num)
    ref = jax.block_until_ready(reference(x, residual, attn, params))

    # 1) Default fast path: bf16 matmuls + bf16 streaming, fused branches,
    #    lane-dense output, single-buffered resident params.  If this Pallas
    #    build rejects pl.Buffered(1), fall back to default buffering.
    single_buffer = True
    try:
        out = jax.block_until_ready(
            output_layer(x, residual, attn, params, n_classes=n_classes))
    except Exception:
        single_buffer = False
        out = jax.block_until_ready(
            output_layer(x, residual, attn, params, n_classes=n_classes,
                         single_buffer_params=False))
    assert out.shape == (B, n_classes)
    assert np.allclose(np.asarray(out), np.asarray(ref), rtol=5e-2, atol=5e-2)

    # 2) Exact-parity escape hatch: f32 matmuls, exact-erf GELU.
    out_f32 = jax.block_until_ready(
        output_layer(x, residual, attn, params, n_classes=n_classes,
                     compute_dtype=jnp.float32,
                     single_buffer_params=single_buffer))
    assert np.allclose(np.asarray(out_f32), np.asarray(ref), rtol=1e-4, atol=1e-4)

    # 3) Multi-step batch grid (>=2 steps), padding, and the non-fused branch path.
    B2 = 20
    k2x, k2r, k2a = jax.random.split(jax.random.PRNGKey(1), 3)
    x2 = jax.random.normal(k2x, (B2, d_in), jnp.float32)
    r2 = jax.random.normal(k2r, (B2, d_in), jnp.float32)
    a2 = jax.random.normal(k2a, (B2, modal_num ** 2), jnp.float32)
    out2 = jax.block_until_ready(
        output_layer(x2, r2, a2, params, n_classes=n_classes, block_b=8,
                     compute_dtype=jnp.float32, fuse_branches=False,
                     single_buffer_params=single_buffer))
    ref2 = jax.block_until_ready(reference(x2, r2, a2, params))
    assert out2.shape == (B2, n_classes)
    assert np.allclose(np.asarray(out2), np.asarray(ref2), rtol=1e-4, atol=1e-4)

    # 4) EUP-friendly tanh-approximate GELU path (nn.GELU(approximate='tanh') numerics).
    out_tanh = jax.block_until_ready(
        output_layer(x, residual, attn, params, n_classes=n_classes,
                     gelu_approx_tanh=True, single_buffer_params=single_buffer))
    ref_tanh = jax.block_until_ready(reference(x, residual, attn, params, gelu_tanh=True))
    assert np.allclose(np.asarray(out_tanh), np.asarray(ref_tanh), rtol=5e-2, atol=5e-2)

    print("KERNEL_OK")
</pallas_src>

<mosaic_0001>
module attributes {stable_mosaic.version = 11 : i64} {
  func.func @_output_layer_kernel(%arg0: i32, %arg1: memref<8x32xbf16, #tpu.memory_space<vmem>>, %arg2: memref<8x32xbf16, #tpu.memory_space<vmem>>, %arg3: memref<8x16xbf16, #tpu.memory_space<vmem>>, %arg4: memref<1x32xf32, #tpu.memory_space<vmem>>, %arg5: memref<1x32xf32, #tpu.memory_space<vmem>>, %arg6: memref<1x32xf32, #tpu.memory_space<vmem>>, %arg7: memref<1x32xf32, #tpu.memory_space<vmem>>, %arg8: memref<64x96xbf16, #tpu.memory_space<vmem>>, %arg9: memref<1x96xf32, #tpu.memory_space<vmem>>, %arg10: memref<96x128xbf16, #tpu.memory_space<vmem>>, %arg11: memref<16x128xbf16, #tpu.memory_space<vmem>>, %arg12: memref<1x128xf32, #tpu.memory_space<vmem>>, %arg13: memref<128x128xbf16, #tpu.memory_space<vmem>>, %arg14: memref<1x128xf32, #tpu.memory_space<vmem>>, %arg15: memref<8x128xf32, #tpu.memory_space<vmem>>) attributes {dimension_semantics = [#tpu.dimension_semantics<parallel>], iteration_bounds = array<i64: 1>, scalar_prefetch = 0 : i64, scratch_operands = 0 : i64, tpu.core_type = #tpu.core_type<tc>, window_params = [{transform_indices = @transform_0, window_bounds = array<i64: 8, 32>}, {transform_indices = @transform_1, window_bounds = array<i64: 8, 32>}, {transform_indices = @transform_2, window_bounds = array<i64: 8, 16>}, {pipeline_mode = #tpu.pipeline_mode<synchronous>, transform_indices = @transform_3, window_bounds = array<i64: 1, 32>}, {pipeline_mode = #tpu.pipeline_mode<synchronous>, transform_indices = @transform_4, window_bounds = array<i64: 1, 32>}, {pipeline_mode = #tpu.pipeline_mode<synchronous>, transform_indices = @transform_5, window_bounds = array<i64: 1, 32>}, {pipeline_mode = #tpu.pipeline_mode<synchronous>, transform_indices = @transform_6, window_bounds = array<i64: 1, 32>}, {pipeline_mode = #tpu.pipeline_mode<synchronous>, transform_indices = @transform_7, window_bounds = array<i64: 64, 96>}, {pipeline_mode = #tpu.pipeline_mode<synchronous>, transform_indices = @transform_8, window_bounds = array<i64: 1, 96>}, {pipeline_mode = #tpu.pipeline_mode<synchronous>, transform_indices = @transform_9, window_bounds = array<i64: 96, 128>}, {pipeline_mode = #tpu.pipeline_mode<synchronous>, transform_indices = @transform_10, window_bounds = array<i64: 16, 128>}, {pipeline_mode = #tpu.pipeline_mode<synchronous>, transform_indices = @transform_11, window_bounds = array<i64: 1, 128>}, {pipeline_mode = #tpu.pipeline_mode<synchronous>, transform_indices = @transform_12, window_bounds = array<i64: 128, 128>}, {pipeline_mode = #tpu.pipeline_mode<synchronous>, transform_indices = @transform_13, window_bounds = array<i64: 1, 128>}, {transform_indices = @transform_14, window_bounds = array<i64: 8, 128>}]} {
    %c0 = arith.constant 0 : index
    %c0_0 = arith.constant 0 : index
    %0 = vector.load %arg1[%c0, %c0_0] : memref<8x32xbf16, #tpu.memory_space<vmem>>, vector<8x32xbf16>
    %1 = arith.extf %0 : vector<8x32xbf16> to vector<8x32xf32>
    %c0_1 = arith.constant 0 : index
    %c0_2 = arith.constant 0 : index
    %2 = vector.load %arg4[%c0_1, %c0_2] : memref<1x32xf32, #tpu.memory_space<vmem>>, vector<1x32xf32>
    %c0_3 = arith.constant 0 : index
    %c0_4 = arith.constant 0 : index
    %3 = vector.load %arg5[%c0_3, %c0_4] : memref<1x32xf32, #tpu.memory_space<vmem>>, vector<1x32xf32>
    %cst = arith.constant dense<0.000000e+00> : vector<8xf32>
    %4 = vector.multi_reduction <add>, %1, %cst [1] : vector<8x32xf32> to vector<8xf32>
    %5 = vector.shape_cast %4 : vector<8xf32> to vector<8x1xf32>
    %cst_5 = arith.constant 3.200000e+01 : f32
    %6 = vector.broadcast %cst_5 : f32 to vector<8x1xf32>
    %7 = arith.divf %5, %6 : vector<8x1xf32>
    %8 = arith.mulf %1, %1 : vector<8x32xf32>
    %cst_6 = arith.constant dense<0.000000e+00> : vector<8xf32>
    %9 = vector.multi_reduction <add>, %8, %cst_6 [1] : vector<8x32xf32> to vector<8xf32>
    %10 = vector.shape_cast %9 : vector<8xf32> to vector<8x1xf32>
    %cst_7 = arith.constant 3.200000e+01 : f32
    %11 = vector.broadcast %cst_7 : f32 to vector<8x1xf32>
    %12 = arith.divf %10, %11 : vector<8x1xf32>
    %13 = arith.mulf %7, %7 : vector<8x1xf32>
    %14 = arith.subf %12, %13 : vector<8x1xf32>
    %cst_8 = arith.constant 0.000000e+00 : f32
    %15 = vector.broadcast %cst_8 : f32 to vector<8x1xf32>
    %16 = arith.maximumf %14, %15 : vector<8x1xf32>
    %17 = vector.broadcast %7 : vector<8x1xf32> to vector<8x32xf32>
    %18 = arith.subf %1, %17 : vector<8x32xf32>
    %cst_9 = arith.constant 9.99999974E-6 : f32
    %19 = vector.broadcast %cst_9 : f32 to vector<8x1xf32>
    %20 = arith.addf %16, %19 : vector<8x1xf32>
    %21 = math.rsqrt %20 : vector<8x1xf32>
    %22 = vector.broadcast %21 : vector<8x1xf32> to vector<8x32xf32>
    %23 = arith.mulf %18, %22 : vector<8x32xf32>
    %24 = vector.broadcast %2 : vector<1x32xf32> to vector<8x32xf32>
    %25 = arith.mulf %23, %24 : vector<8x32xf32>
    %26 = vector.broadcast %3 : vector<1x32xf32> to vector<8x32xf32>
    %27 = arith.addf %25, %26 : vector<8x32xf32>
    %c0_10 = arith.constant 0 : index
    %c0_11 = arith.constant 0 : index
    %28 = vector.load %arg2[%c0_10, %c0_11] : memref<8x32xbf16, #tpu.memory_space<vmem>>, vector<8x32xbf16>
    %29 = arith.extf %28 : vector<8x32xbf16> to vector<8x32xf32>
    %c0_12 = arith.constant 0 : index
    %c0_13 = arith.constant 0 : index
    %30 = vector.load %arg6[%c0_12, %c0_13] : memref<1x32xf32, #tpu.memory_space<vmem>>, vector<1x32xf32>
    %c0_14 = arith.constant 0 : index
    %c0_15 = arith.constant 0 : index
    %31 = vector.load %arg7[%c0_14, %c0_15] : memref<1x32xf32, #tpu.memory_space<vmem>>, vector<1x32xf32>
    %cst_16 = arith.constant dense<0.000000e+00> : vector<8xf32>
    %32 = vector.multi_reduction <add>, %29, %cst_16 [1] : vector<8x32xf32> to vector<8xf32>
    %33 = vector.shape_cast %32 : vector<8xf32> to vector<8x1xf32>
    %cst_17 = arith.constant 3.200000e+01 : f32
    %34 = vector.broadcast %cst_17 : f32 to vector<8x1xf32>
    %35 = arith.divf %33, %34 : vector<8x1xf32>
    %36 = arith.mulf %29, %29 : vector<8x32xf32>
    %cst_18 = arith.constant dense<0.000000e+00> : vector<8xf32>
    %37 = vector.multi_reduction <add>, %36, %cst_18 [1] : vector<8x32xf32> to vector<8xf32>
    %38 = vector.shape_cast %37 : vector<8xf32> to vector<8x1xf32>
    %cst_19 = arith.constant 3.200000e+01 : f32
    %39 = vector.broadcast %cst_19 : f32 to vector<8x1xf32>
    %40 = arith.divf %38, %39 : vector<8x1xf32>
    %41 = arith.mulf %35, %35 : vector<8x1xf32>
    %42 = arith.subf %40, %41 : vector<8x1xf32>
    %cst_20 = arith.constant 0.000000e+00 : f32
    %43 = vector.broadcast %cst_20 : f32 to vector<8x1xf32>
    %44 = arith.maximumf %42, %43 : vector<8x1xf32>
    %45 = vector.broadcast %35 : vector<8x1xf32> to vector<8x32xf32>
    %46 = arith.subf %29, %45 : vector<8x32xf32>
    %cst_21 = arith.constant 9.99999974E-6 : f32
    %47 = vector.broadcast %cst_21 : f32 to vector<8x1xf32>
    %48 = arith.addf %44, %47 : vector<8x1xf32>
    %49 = math.rsqrt %48 : vector<8x1xf32>
    %50 = vector.broadcast %49 : vector<8x1xf32> to vector<8x32xf32>
    %51 = arith.mulf %46, %50 : vector<8x32xf32>
    %52 = vector.broadcast %30 : vector<1x32xf32> to vector<8x32xf32>
    %53 = arith.mulf %51, %52 : vector<8x32xf32>
    %54 = vector.broadcast %31 : vector<1x32xf32> to vector<8x32xf32>
    %55 = arith.addf %53, %54 : vector<8x32xf32>
    %56 = tpu.concatenate %27, %55 in 1 : vector<8x32xf32>, vector<8x32xf32> -> vector<8x64xf32>
    %57 = arith.truncf %56 : vector<8x64xf32> to vector<8x64xbf16>
    %c0_22 = arith.constant 0 : index
    %c0_23 = arith.constant 0 : index
    %58 = vector.load %arg8[%c0_22, %c0_23] : memref<64x96xbf16, #tpu.memory_space<vmem>>, vector<64x96xbf16>
    %cst_24 = arith.constant dense<0.000000e+00> : vector<8x96xf32>
    %59 = tpu.matmul %57, %58, %cst_24 {dimension_numbers = #tpu.dot_dimension_numbers<[1], [0], [0], [1], [0, 0, 1, 1], [], []>} : vector<8x64xbf16>, vector<64x96xbf16>, vector<8x96xf32> -> vector<8x96xf32>
    %c0_25 = arith.constant 0 : index
    %c0_26 = arith.constant 0 : index
    %60 = vector.load %arg9[%c0_25, %c0_26] : memref<1x96xf32, #tpu.memory_space<vmem>>, vector<1x96xf32>
    %61 = vector.broadcast %60 : vector<1x96xf32> to vector<8x96xf32>
    %62 = arith.addf %59, %61 : vector<8x96xf32>
    %cst_27 = arith.constant 5.000000e-01 : f32
    %63 = vector.broadcast %cst_27 : f32 to vector<8x96xf32>
    %64 = arith.mulf %63, %62 : vector<8x96xf32>
    %cst_28 = arith.constant 0.707106769 : f32
    %65 = vector.broadcast %cst_28 : f32 to vector<8x96xf32>
    %66 = arith.mulf %62, %65 : vector<8x96xf32>
    %67 = math.erf %66 : vector<8x96xf32>
    %cst_29 = arith.constant 1.000000e+00 : f32
    %68 = vector.broadcast %cst_29 : f32 to vector<8x96xf32>
    %69 = arith.addf %68, %67 : vector<8x96xf32>
    %70 = arith.mulf %64, %69 : vector<8x96xf32>
    %71 = arith.truncf %70 : vector<8x96xf32> to vector<8x96xbf16>
    %c0_30 = arith.constant 0 : index
    %c0_31 = arith.constant 0 : index
    %72 = vector.load %arg10[%c0_30, %c0_31] : memref<96x128xbf16, #tpu.memory_space<vmem>>, vector<96x128xbf16>
    %cst_32 = arith.constant dense<0.000000e+00> : vector<8x128xf32>
    %73 = tpu.matmul %71, %72, %cst_32 {dimension_numbers = #tpu.dot_dimension_numbers<[1], [0], [0], [1], [0, 0, 1, 1], [], []>} : vector<8x96xbf16>, vector<96x128xbf16>, vector<8x128xf32> -> vector<8x128xf32>
    %c0_33 = arith.constant 0 : index
    %c0_34 = arith.constant 0 : index
    %74 = vector.load %arg3[%c0_33, %c0_34] : memref<8x16xbf16, #tpu.memory_space<vmem>>, vector<8x16xbf16>
    %c0_35 = arith.constant 0 : index
    %c0_36 = arith.constant 0 : index
    %75 = vector.load %arg11[%c0_35, %c0_36] : memref<16x128xbf16, #tpu.memory_space<vmem>>, vector<16x128xbf16>
    %cst_37 = arith.constant dense<0.000000e+00> : vector<8x128xf32>
    %76 = tpu.matmul %74, %75, %cst_37 {dimension_numbers = #tpu.dot_dimension_numbers<[1], [0], [0], [1], [0, 0, 1, 1], [], []>} : vector<8x16xbf16>, vector<16x128xbf16>, vector<8x128xf32> -> vector<8x128xf32>
    %77 = arith.addf %73, %76 : vector<8x128xf32>
    %c0_38 = arith.constant 0 : index
    %c0_39 = arith.constant 0 : index
    %78 = vector.load %arg12[%c0_38, %c0_39] : memref<1x128xf32, #tpu.memory_space<vmem>>, vector<1x128xf32>
    %79 = vector.broadcast %78 : vector<1x128xf32> to vector<8x128xf32>
    %80 = arith.addf %77, %79 : vector<8x128xf32>
    %cst_40 = arith.constant 2.000000e+01 : f32
    %81 = vector.broadcast %cst_40 : f32 to vector<8x128xf32>
    %82 = arith.minimumf %80, %81 : vector<8x128xf32>
    %83 = math.exp %82 : vector<8x128xf32>
    %cst_41 = arith.constant 1.000000e+00 : f32
    %84 = vector.broadcast %cst_41 : f32 to vector<8x128xf32>
    %85 = arith.addf %84, %83 : vector<8x128xf32>
    %86 = arith.mulf %85, %85 : vector<8x128xf32>
    %cst_42 = arith.constant 1.000000e+00 : f32
    %87 = vector.broadcast %cst_42 : f32 to vector<8x128xf32>
    %88 = arith.addf %86, %87 : vector<8x128xf32>
    %89 = tpu.reciprocal %88 {approx = true} : vector<8x128xf32> -> vector<8x128xf32>
    %90 = arith.mulf %88, %89 : vector<8x128xf32>
    %cst_43 = arith.constant 2.000000e+00 : f32
    %91 = vector.broadcast %cst_43 : f32 to vector<8x128xf32>
    %92 = arith.subf %91, %90 : vector<8x128xf32>
    %93 = arith.mulf %89, %92 : vector<8x128xf32>
    %94 = arith.mulf %88, %93 : vector<8x128xf32>
    %cst_44 = arith.constant 2.000000e+00 : f32
    %95 = vector.broadcast %cst_44 : f32 to vector<8x128xf32>
    %96 = arith.subf %95, %94 : vector<8x128xf32>
    %97 = arith.mulf %93, %96 : vector<8x128xf32>
    %cst_45 = arith.constant 2.000000e+00 : f32
    %98 = vector.broadcast %cst_45 : f32 to vector<8x128xf32>
    %99 = arith.mulf %98, %97 : vector<8x128xf32>
    %cst_46 = arith.constant 1.000000e+00 : f32
    %100 = vector.broadcast %cst_46 : f32 to vector<8x128xf32>
    %101 = arith.subf %100, %99 : vector<8x128xf32>
    %102 = arith.mulf %80, %101 : vector<8x128xf32>
    %cst_47 = arith.constant 2.000000e+01 : f32
    %103 = vector.broadcast %cst_47 : f32 to vector<8x128xf32>
    %104 = arith.cmpf ogt, %80, %103 : vector<8x128xf32>
    %105 = arith.select %104, %80, %102 : vector<8x128xi1>, vector<8x128xf32>
    %106 = arith.truncf %105 : vector<8x128xf32> to vector<8x128xbf16>
    %c0_48 = arith.constant 0 : index
    %c0_49 = arith.constant 0 : index
    %107 = vector.load %arg13[%c0_48, %c0_49] : memref<128x128xbf16, #tpu.memory_space<vmem>>, vector<128x128xbf16>
    %cst_50 = arith.constant dense<0.000000e+00> : vector<8x128xf32>
    %108 = tpu.matmul %106, %107, %cst_50 {dimension_numbers = #tpu.dot_dimension_numbers<[1], [0], [0], [1], [0, 0, 1, 1], [], []>} : vector<8x128xbf16>, vector<128x128xbf16>, vector<8x128xf32> -> vector<8x128xf32>
    %c0_51 = arith.constant 0 : index
    %c0_52 = arith.constant 0 : index
    %109 = vector.load %arg14[%c0_51, %c0_52] : memref<1x128xf32, #tpu.memory_space<vmem>>, vector<1x128xf32>
    %110 = vector.broadcast %109 : vector<1x128xf32> to vector<8x128xf32>
    %111 = arith.addf %108, %110 : vector<8x128xf32>
    %c0_53 = arith.constant 0 : index
    %c0_54 = arith.constant 0 : index
    %112 = vector.load %arg15[%c0_53, %c0_54] : memref<8x128xf32, #tpu.memory_space<vmem>>, vector<8x128xf32>
    tpu.vector_store %arg15[%c0_53, %c0_54], %111 {strides = array<i32>} : memref<8x128xf32, #tpu.memory_space<vmem>>, vector<8x128xf32>,
    return
  }
  func.func @transform_0(%arg0: i32) -> (i32, i32) {
    %c0_i32 = arith.constant 0 : i32
    %c0_i32_0 = arith.constant 0 : i32
    return %arg0, %c0_i32 : i32, i32
  }
  func.func @transform_1(%arg0: i32) -> (i32, i32) {
    %c0_i32 = arith.constant 0 : i32
    %c0_i32_0 = arith.constant 0 : i32
    return %arg0, %c0_i32 : i32, i32
  }
  func.func @transform_2(%arg0: i32) -> (i32, i32) {
    %c0_i32 = arith.constant 0 : i32
    %c0_i32_0 = arith.constant 0 : i32
    return %arg0, %c0_i32 : i32, i32
  }
  func.func @transform_3(%arg0: i32) -> (i32, i32) {
    %c0_i32 = arith.constant 0 : i32
    %c0_i32_0 = arith.constant 0 : i32
    %c0_i32_1 = arith.constant 0 : i32
    return %c0_i32, %c0_i32_0 : i32, i32
  }
  func.func @transform_4(%arg0: i32) -> (i32, i32) {
    %c0_i32 = arith.constant 0 : i32
    %c0_i32_0 = arith.constant 0 : i32
    %c0_i32_1 = arith.constant 0 : i32
    return %c0_i32, %c0_i32_0 : i32, i32
  }
  func.func @transform_5(%arg0: i32) -> (i32, i32) {
    %c0_i32 = arith.constant 0 : i32
    %c0_i32_0 = arith.constant 0 : i32
    %c0_i32_1 = arith.constant 0 : i32
    return %c0_i32, %c0_i32_0 : i32, i32
  }
  func.func @transform_6(%arg0: i32) -> (i32, i32) {
    %c0_i32 = arith.constant 0 : i32
    %c0_i32_0 = arith.constant 0 : i32
    %c0_i32_1 = arith.constant 0 : i32
    return %c0_i32, %c0_i32_0 : i32, i32
  }
  func.func @transform_7(%arg0: i32) -> (i32, i32) {
    %c0_i32 = arith.constant 0 : i32
    %c0_i32_0 = arith.constant 0 : i32
    %c0_i32_1 = arith.constant 0 : i32
    return %c0_i32, %c0_i32_0 : i32, i32
  }
  func.func @transform_8(%arg0: i32) -> (i32, i32) {
    %c0_i32 = arith.constant 0 : i32
    %c0_i32_0 = arith.constant 0 : i32
    %c0_i32_1 = arith.constant 0 : i32
    return %c0_i32, %c0_i32_0 : i32, i32
  }
  func.func @transform_9(%arg0: i32) -> (i32, i32) {
    %c0_i32 = arith.constant 0 : i32
    %c0_i32_0 = arith.constant 0 : i32
    %c0_i32_1 = arith.constant 0 : i32
    return %c0_i32, %c0_i32_0 : i32, i32
  }
  func.func @transform_10(%arg0: i32) -> (i32, i32) {
    %c0_i32 = arith.constant 0 : i32
    %c0_i32_0 = arith.constant 0 : i32
    %c0_i32_1 = arith.constant 0 : i32
    return %c0_i32, %c0_i32_0 : i32, i32
  }
  func.func @transform_11(%arg0: i32) -> (i32, i32) {
    %c0_i32 = arith.constant 0 : i32
    %c0_i32_0 = arith.constant 0 : i32
    %c0_i32_1 = arith.constant 0 : i32
    return %c0_i32, %c0_i32_0 : i32, i32
  }
  func.func @transform_12(%arg0: i32) -> (i32, i32) {
    %c0_i32 = arith.constant 0 : i32
    %c0_i32_0 = arith.constant 0 : i32
    %c0_i32_1 = arith.constant 0 : i32
    return %c0_i32, %c0_i32_0 : i32, i32
  }
  func.func @transform_13(%arg0: i32) -> (i32, i32) {
    %c0_i32 = arith.constant 0 : i32
    %c0_i32_0 = arith.constant 0 : i32
    %c0_i32_1 = arith.constant 0 : i32
    return %c0_i32, %c0_i32_0 : i32, i32
  }
  func.func @transform_14(%arg0: i32) -> (i32, i32) {
    %c0_i32 = arith.constant 0 : i32
    %c0_i32_0 = arith.constant 0 : i32
    return %arg0, %c0_i32 : i32, i32
  }
}

module attributes {stable_mosaic.version = 11 : i64} {
  func.func @_output_layer_kernel(%arg0: i32, %arg1: memref<8x32xbf16, #tpu.memory_space<vmem>>, %arg2: memref<8x32xbf16, #tpu.memory_space<vmem>>, %arg3: memref<8x16xbf16, #tpu.memory_space<vmem>>, %arg4: memref<1x32xf32, #tpu.memory_space<vmem>>, %arg5: memref<1x32xf32, #tpu.memory_space<vmem>>, %arg6: memref<1x32xf32, #tpu.memory_space<vmem>>, %arg7: memref<1x32xf32, #tpu.memory_space<vmem>>, %arg8: memref<64x96xbf16, #tpu.memory_space<vmem>>, %arg9: memref<1x96xf32, #tpu.memory_space<vmem>>, %arg10: memref<96x128xbf16, #tpu.memory_space<vmem>>, %arg11: memref<16x128xbf16, #tpu.memory_space<vmem>>, %arg12: memref<1x128xf32, #tpu.memory_space<vmem>>, %arg13: memref<128x128xbf16, #tpu.memory_space<vmem>>, %arg14: memref<1x128xf32, #tpu.memory_space<vmem>>, %arg15: memref<8x128xf32, #tpu.memory_space<vmem>>) attributes {dimension_semantics = [#tpu.dimension_semantics<parallel>], iteration_bounds = array<i64: 1>, scalar_prefetch = 0 : i64, scratch_operands = 0 : i64, tpu.core_type = #tpu.core_type<tc>, window_params = [{transform_indices = @transform_0, window_bounds = array<i64: 8, 32>}, {transform_indices = @transform_1, window_bounds = array<i64: 8, 32>}, {transform_indices = @transform_2, window_bounds = array<i64: 8, 16>}, {pipeline_mode = #tpu.pipeline_mode<synchronous>, transform_indices = @transform_3, window_bounds = array<i64: 1, 32>}, {pipeline_mode = #tpu.pipeline_mode<synchronous>, transform_indices = @transform_4, window_bounds = array<i64: 1, 32>}, {pipeline_mode = #tpu.pipeline_mode<synchronous>, transform_indices = @transform_5, window_bounds = array<i64: 1, 32>}, {pipeline_mode = #tpu.pipeline_mode<synchronous>, transform_indices = @transform_6, window_bounds = array<i64: 1, 32>}, {pipeline_mode = #tpu.pipeline_mode<synchronous>, transform_indices = @transform_7, window_bounds = array<i64: 64, 96>}, {pipeline_mode = #tpu.pipeline_mode<synchronous>, transform_indices = @transform_8, window_bounds = array<i64: 1, 96>}, {pipeline_mode = #tpu.pipeline_mode<synchronous>, transform_indices = @transform_9, window_bounds = array<i64: 96, 128>}, {pipeline_mode = #tpu.pipeline_mode<synchronous>, transform_indices = @transform_10, window_bounds = array<i64: 16, 128>}, {pipeline_mode = #tpu.pipeline_mode<synchronous>, transform_indices = @transform_11, window_bounds = array<i64: 1, 128>}, {pipeline_mode = #tpu.pipeline_mode<synchronous>, transform_indices = @transform_12, window_bounds = array<i64: 128, 128>}, {pipeline_mode = #tpu.pipeline_mode<synchronous>, transform_indices = @transform_13, window_bounds = array<i64: 1, 128>}, {transform_indices = @transform_14, window_bounds = array<i64: 8, 128>}]} {
    %c0 = arith.constant 0 : index
    %c0_0 = arith.constant 0 : index
    %0 = vector.load %arg1[%c0, %c0_0] : memref<8x32xbf16, #tpu.memory_space<vmem>>, vector<8x32xbf16>
    %1 = arith.extf %0 : vector<8x32xbf16> to vector<8x32xf32>
    %c0_1 = arith.constant 0 : index
    %c0_2 = arith.constant 0 : index
    %2 = vector.load %arg4[%c0_1, %c0_2] : memref<1x32xf32, #tpu.memory_space<vmem>>, vector<1x32xf32>
    %c0_3 = arith.constant 0 : index
    %c0_4 = arith.constant 0 : index
    %3 = vector.load %arg5[%c0_3, %c0_4] : memref<1x32xf32, #tpu.memory_space<vmem>>, vector<1x32xf32>
    %cst = arith.constant dense<0.000000e+00> : vector<8xf32>
    %4 = vector.multi_reduction <add>, %1, %cst [1] : vector<8x32xf32> to vector<8xf32>
    %5 = vector.shape_cast %4 : vector<8xf32> to vector<8x1xf32>
    %cst_5 = arith.constant 3.200000e+01 : f32
    %6 = vector.broadcast %cst_5 : f32 to vector<8x1xf32>
    %7 = arith.divf %5, %6 : vector<8x1xf32>
    %8 = arith.mulf %1, %1 : vector<8x32xf32>
    %cst_6 = arith.constant dense<0.000000e+00> : vector<8xf32>
    %9 = vector.multi_reduction <add>, %8, %cst_6 [1] : vector<8x32xf32> to vector<8xf32>
    %10 = vector.shape_cast %9 : vector<8xf32> to vector<8x1xf32>
    %cst_7 = arith.constant 3.200000e+01 : f32
    %11 = vector.broadcast %cst_7 : f32 to vector<8x1xf32>
    %12 = arith.divf %10, %11 : vector<8x1xf32>
    %13 = arith.mulf %7, %7 : vector<8x1xf32>
    %14 = arith.subf %12, %13 : vector<8x1xf32>
    %cst_8 = arith.constant 0.000000e+00 : f32
    %15 = vector.broadcast %cst_8 : f32 to vector<8x1xf32>
    %16 = arith.maximumf %14, %15 : vector<8x1xf32>
    %17 = vector.broadcast %7 : vector<8x1xf32> to vector<8x32xf32>
    %18 = arith.subf %1, %17 : vector<8x32xf32>
    %cst_9 = arith.constant 9.99999974E-6 : f32
    %19 = vector.broadcast %cst_9 : f32 to vector<8x1xf32>
    %20 = arith.addf %16, %19 : vector<8x1xf32>
    %21 = math.rsqrt %20 : vector<8x1xf32>
    %22 = vector.broadcast %21 : vector<8x1xf32> to vector<8x32xf32>
    %23 = arith.mulf %18, %22 : vector<8x32xf32>
    %24 = vector.broadcast %2 : vector<1x32xf32> to vector<8x32xf32>
    %25 = arith.mulf %23, %24 : vector<8x32xf32>
    %26 = vector.broadcast %3 : vector<1x32xf32> to vector<8x32xf32>
    %27 = arith.addf %25, %26 : vector<8x32xf32>
    %c0_10 = arith.constant 0 : index
    %c0_11 = arith.constant 0 : index
    %28 = vector.load %arg2[%c0_10, %c0_11] : memref<8x32xbf16, #tpu.memory_space<vmem>>, vector<8x32xbf16>
    %29 = arith.extf %28 : vector<8x32xbf16> to vector<8x32xf32>
    %c0_12 = arith.constant 0 : index
    %c0_13 = arith.constant 0 : index
    %30 = vector.load %arg6[%c0_12, %c0_13] : memref<1x32xf32, #tpu.memory_space<vmem>>, vector<1x32xf32>
    %c0_14 = arith.constant 0 : index
    %c0_15 = arith.constant 0 : index
    %31 = vector.load %arg7[%c0_14, %c0_15] : memref<1x32xf32, #tpu.memory_space<vmem>>, vector<1x32xf32>
    %cst_16 = arith.constant dense<0.000000e+00> : vector<8xf32>
    %32 = vector.multi_reduction <add>, %29, %cst_16 [1] : vector<8x32xf32> to vector<8xf32>
    %33 = vector.shape_cast %32 : vector<8xf32> to vector<8x1xf32>
    %cst_17 = arith.constant 3.200000e+01 : f32
    %34 = vector.broadcast %cst_17 : f32 to vector<8x1xf32>
    %35 = arith.divf %33, %34 : vector<8x1xf32>
    %36 = arith.mulf %29, %29 : vector<8x32xf32>
    %cst_18 = arith.constant dense<0.000000e+00> : vector<8xf32>
    %37 = vector.multi_reduction <add>, %36, %cst_18 [1] : vector<8x32xf32> to vector<8xf32>
    %38 = vector.shape_cast %37 : vector<8xf32> to vector<8x1xf32>
    %cst_19 = arith.constant 3.200000e+01 : f32
    %39 = vector.broadcast %cst_19 : f32 to vector<8x1xf32>
    %40 = arith.divf %38, %39 : vector<8x1xf32>
    %41 = arith.mulf %35, %35 : vector<8x1xf32>
    %42 = arith.subf %40, %41 : vector<8x1xf32>
    %cst_20 = arith.constant 0.000000e+00 : f32
    %43 = vector.broadcast %cst_20 : f32 to vector<8x1xf32>
    %44 = arith.maximumf %42, %43 : vector<8x1xf32>
    %45 = vector.broadcast %35 : vector<8x1xf32> to vector<8x32xf32>
    %46 = arith.subf %29, %45 : vector<8x32xf32>
    %cst_21 = arith.constant 9.99999974E-6 : f32
    %47 = vector.broadcast %cst_21 : f32 to vector<8x1xf32>
    %48 = arith.addf %44, %47 : vector<8x1xf32>
    %49 = math.rsqrt %48 : vector<8x1xf32>
    %50 = vector.broadcast %49 : vector<8x1xf32> to vector<8x32xf32>
    %51 = arith.mulf %46, %50 : vector<8x32xf32>
    %52 = vector.broadcast %30 : vector<1x32xf32> to vector<8x32xf32>
    %53 = arith.mulf %51, %52 : vector<8x32xf32>
    %54 = vector.broadcast %31 : vector<1x32xf32> to vector<8x32xf32>
    %55 = arith.addf %53, %54 : vector<8x32xf32>
    %56 = tpu.concatenate %27, %55 in 1 : vector<8x32xf32>, vector<8x32xf32> -> vector<8x64xf32>
    %57 = arith.truncf %56 : vector<8x64xf32> to vector<8x64xbf16>
    %c0_22 = arith.constant 0 : index
    %c0_23 = arith.constant 0 : index
    %58 = vector.load %arg8[%c0_22, %c0_23] : memref<64x96xbf16, #tpu.memory_space<vmem>>, vector<64x96xbf16>
    %cst_24 = arith.constant dense<0.000000e+00> : vector<8x96xf32>
    %59 = tpu.matmul %57, %58, %cst_24 {dimension_numbers = #tpu.dot_dimension_numbers<[1], [0], [0], [1], [0, 0, 1, 1], [], []>} : vector<8x64xbf16>, vector<64x96xbf16>, vector<8x96xf32> -> vector<8x96xf32>
    %c0_25 = arith.constant 0 : index
    %c0_26 = arith.constant 0 : index
    %60 = vector.load %arg9[%c0_25, %c0_26] : memref<1x96xf32, #tpu.memory_space<vmem>>, vector<1x96xf32>
    %61 = vector.broadcast %60 : vector<1x96xf32> to vector<8x96xf32>
    %62 = arith.addf %59, %61 : vector<8x96xf32>
    %cst_27 = arith.constant 5.000000e-01 : f32
    %63 = vector.broadcast %cst_27 : f32 to vector<8x96xf32>
    %64 = arith.mulf %63, %62 : vector<8x96xf32>
    %cst_28 = arith.constant 0.707106769 : f32
    %65 = vector.broadcast %cst_28 : f32 to vector<8x96xf32>
    %66 = arith.mulf %62, %65 : vector<8x96xf32>
    %67 = math.erf %66 : vector<8x96xf32>
    %cst_29 = arith.constant 1.000000e+00 : f32
    %68 = vector.broadcast %cst_29 : f32 to vector<8x96xf32>
    %69 = arith.addf %68, %67 : vector<8x96xf32>
    %70 = arith.mulf %64, %69 : vector<8x96xf32>
    %71 = arith.truncf %70 : vector<8x96xf32> to vector<8x96xbf16>
    %c0_30 = arith.constant 0 : index
    %c0_31 = arith.constant 0 : index
    %72 = vector.load %arg10[%c0_30, %c0_31] : memref<96x128xbf16, #tpu.memory_space<vmem>>, vector<96x128xbf16>
    %cst_32 = arith.constant dense<0.000000e+00> : vector<8x128xf32>
    %73 = tpu.matmul %71, %72, %cst_32 {dimension_numbers = #tpu.dot_dimension_numbers<[1], [0], [0], [1], [0, 0, 1, 1], [], []>} : vector<8x96xbf16>, vector<96x128xbf16>, vector<8x128xf32> -> vector<8x128xf32>
    %c0_33 = arith.constant 0 : index
    %c0_34 = arith.constant 0 : index
    %74 = vector.load %arg3[%c0_33, %c0_34] : memref<8x16xbf16, #tpu.memory_space<vmem>>, vector<8x16xbf16>
    %c0_35 = arith.constant 0 : index
    %c0_36 = arith.constant 0 : index
    %75 = vector.load %arg11[%c0_35, %c0_36] : memref<16x128xbf16, #tpu.memory_space<vmem>>, vector<16x128xbf16>
    %cst_37 = arith.constant dense<0.000000e+00> : vector<8x128xf32>
    %76 = tpu.matmul %74, %75, %cst_37 {dimension_numbers = #tpu.dot_dimension_numbers<[1], [0], [0], [1], [0, 0, 1, 1], [], []>} : vector<8x16xbf16>, vector<16x128xbf16>, vector<8x128xf32> -> vector<8x128xf32>
    %77 = arith.addf %73, %76 : vector<8x128xf32>
    %c0_38 = arith.constant 0 : index
    %c0_39 = arith.constant 0 : index
    %78 = vector.load %arg12[%c0_38, %c0_39] : memref<1x128xf32, #tpu.memory_space<vmem>>, vector<1x128xf32>
    %79 = vector.broadcast %78 : vector<1x128xf32> to vector<8x128xf32>
    %80 = arith.addf %77, %79 : vector<8x128xf32>
    %cst_40 = arith.constant 2.000000e+01 : f32
    %81 = vector.broadcast %cst_40 : f32 to vector<8x128xf32>
    %82 = arith.minimumf %80, %81 : vector<8x128xf32>
    %83 = math.exp %82 : vector<8x128xf32>
    %cst_41 = arith.constant 1.000000e+00 : f32
    %84 = vector.broadcast %cst_41 : f32 to vector<8x128xf32>
    %85 = arith.addf %84, %83 : vector<8x128xf32>
    %86 = arith.mulf %85, %85 : vector<8x128xf32>
    %cst_42 = arith.constant 1.000000e+00 : f32
    %87 = vector.broadcast %cst_42 : f32 to vector<8x128xf32>
    %88 = arith.addf %86, %87 : vector<8x128xf32>
    %89 = tpu.reciprocal %88 {approx = true} : vector<8x128xf32> -> vector<8x128xf32>
    %90 = arith.mulf %88, %89 : vector<8x128xf32>
    %cst_43 = arith.constant 2.000000e+00 : f32
    %91 = vector.broadcast %cst_43 : f32 to vector<8x128xf32>
    %92 = arith.subf %91, %90 : vector<8x128xf32>
    %93 = arith.mulf %89, %92 : vector<8x128xf32>
    %94 = arith.mulf %88, %93 : vector<8x128xf32>
    %cst_44 = arith.constant 2.000000e+00 : f32
    %95 = vector.broadcast %cst_44 : f32 to vector<8x128xf32>
    %96 = arith.subf %95, %94 : vector<8x128xf32>
    %97 = arith.mulf %93, %96 : vector<8x128xf32>
    %cst_45 = arith.constant 2.000000e+00 : f32
    %98 = vector.broadcast %cst_45 : f32 to vector<8x128xf32>
    %99 = arith.mulf %98, %97 : vector<8x128xf32>
    %cst_46 = arith.constant 1.000000e+00 : f32
    %100 = vector.broadcast %cst_46 : f32 to vector<8x128xf32>
    %101 = arith.subf %100, %99 : vector<8x128xf32>
    %102 = arith.mulf %80, %101 : vector<8x128xf32>
    %cst_47 = arith.constant 2.000000e+01 : f32
    %103 = vector.broadcast %cst_47 : f32 to vector<8x128xf32>
    %104 = arith.cmpf ogt, %80, %103 : vector<8x128xf32>
    %105 = arith.select %104, %80, %102 : vector<8x128xi1>, vector<8x128xf32>
    %106 = arith.truncf %105 : vector<8x128xf32> to vector<8x128xbf16>
    %c0_48 = arith.constant 0 : index
    %c0_49 = arith.constant 0 : index
    %107 = vector.load %arg13[%c0_48, %c0_49] : memref<128x128xbf16, #tpu.memory_space<vmem>>, vector<128x128xbf16>
    %cst_50 = arith.constant dense<0.000000e+00> : vector<8x128xf32>
    %108 = tpu.matmul %106, %107, %cst_50 {dimension_numbers = #tpu.dot_dimension_numbers<[1], [0], [0], [1], [0, 0, 1, 1], [], []>} : vector<8x128xbf16>, vector<128x128xbf16>, vector<8x128xf32> -> vector<8x128xf32>
    %c0_51 = arith.constant 0 : index
    %c0_52 = arith.constant 0 : index
    %109 = vector.load %arg14[%c0_51, %c0_52] : memref<1x128xf32, #tpu.memory_space<vmem>>, vector<1x128xf32>
    %110 = vector.broadcast %109 : vector<1x128xf32> to vector<8x128xf32>
    %111 = arith.addf %108, %110 : vector<8x128xf32>
    %c0_53 = arith.constant 0 : index
    %c0_54 = arith.constant 0 : index
    %112 = vector.load %arg15[%c0_53, %c0_54] : memref<8x128xf32, #tpu.memory_space<vmem>>, vector<8x128xf32>
    tpu.vector_store %arg15[%c0_53, %c0_54], %111 {strides = array<i32>} : memref<8x128xf32, #tpu.memory_space<vmem>>, vector<8x128xf32>,
    return
  }
  func.func @transform_0(%arg0: i32) -> (i32, i32) {
    %c0_i32 = arith.constant 0 : i32
    %c0_i32_0 = arith.constant 0 : i32
    return %arg0, %c0_i32 : i32, i32
  }
  func.func @transform_1(%arg0: i32) -> (i32, i32) {
    %c0_i32 = arith.constant 0 : i32
    %c0_i32_0 = arith.constant 0 : i32
    return %arg0, %c0_i32 : i32, i32
  }
  func.func @transform_2(%arg0: i32) -> (i32, i32) {
    %c0_i32 = arith.constant 0 : i32
    %c0_i32_0 = arith.constant 0 : i32
    return %arg0, %c0_i32 : i32, i32
  }
  func.func @transform_3(%arg0: i32) -> (i32, i32) {
    %c0_i32 = arith.constant 0 : i32
    %c0_i32_0 = arith.constant 0 : i32
    %c0_i32_1 = arith.constant 0 : i32
    return %c0_i32, %c0_i32_0 : i32, i32
  }
  func.func @transform_4(%arg0: i32) -> (i32, i32) {
    %c0_i32 = arith.constant 0 : i32
    %c0_i32_0 = arith.constant 0 : i32
    %c0_i32_1 = arith.constant 0 : i32
    return %c0_i32, %c0_i32_0 : i32, i32
  }
  func.func @transform_5(%arg0: i32) -> (i32, i32) {
    %c0_i32 = arith.constant 0 : i32
    %c0_i32_0 = arith.constant 0 : i32
    %c0_i32_1 = arith.constant 0 : i32
    return %c0_i32, %c0_i32_0 : i32, i32
  }
  func.func @transform_6(%arg0: i32) -> (i32, i32) {
    %c0_i32 = arith.constant 0 : i32
    %c0_i32_0 = arith.constant 0 : i32
    %c0_i32_1 = arith.constant 0 : i32
    return %c0_i32, %c0_i32_0 : i32, i32
  }
  func.func @transform_7(%arg0: i32) -> (i32, i32) {
    %c0_i32 = arith.constant 0 : i32
    %c0_i32_0 = arith.constant 0 : i32
    %c0_i32_1 = arith.constant 0 : i32
    return %c0_i32, %c0_i32_0 : i32, i32
  }
  func.func @transform_8(%arg0: i32) -> (i32, i32) {
    %c0_i32 = arith.constant 0 : i32
    %c0_i32_0 = arith.constant 0 : i32
    %c0_i32_1 = arith.constant 0 : i32
    return %c0_i32, %c0_i32_0 : i32, i32
  }
  func.func @transform_9(%arg0: i32) -> (i32, i32) {
    %c0_i32 = arith.constant 0 : i32
    %c0_i32_0 = arith.constant 0 : i32
    %c0_i32_1 = arith.constant 0 : i32
    return %c0_i32, %c0_i32_0 : i32, i32
  }
  func.func @transform_10(%arg0: i32) -> (i32, i32) {
    %c0_i32 = arith.constant 0 : i32
    %c0_i32_0 = arith.constant 0 : i32
    %c0_i32_1 = arith.constant 0 : i32
    return %c0_i32, %c0_i32_0 : i32, i32
  }
  func.func @transform_11(%arg0: i32) -> (i32, i32) {
    %c0_i32 = arith.constant 0 : i32
    %c0_i32_0 = arith.constant 0 : i32
    %c0_i32_1 = arith.constant 0 : i32
    return %c0_i32, %c0_i32_0 : i32, i32
  }
  func.func @transform_12(%arg0: i32) -> (i32, i32) {
    %c0_i32 = arith.constant 0 : i32
    %c0_i32_0 = arith.constant 0 : i32
    %c0_i32_1 = arith.constant 0 : i32
    return %c0_i32, %c0_i32_0 : i32, i32
  }
  func.func @transform_13(%arg0: i32) -> (i32, i32) {
    %c0_i32 = arith.constant 0 : i32
    %c0_i32_0 = arith.constant 0 : i32
    %c0_i32_1 = arith.constant 0 : i32
    return %c0_i32, %c0_i32_0 : i32, i32
  }
  func.func @transform_14(%arg0: i32) -> (i32, i32) {
    %c0_i32 = arith.constant 0 : i32
    %c0_i32_0 = arith.constant 0 : i32
    return %arg0, %c0_i32 : i32, i32
  }
}

</mosaic_0001>

<llo_original>
// kernel: output_layer.1
$region0: #{output_layer.1}
  #allocation0 [shape = 'u32[]', space=smem, size = 0x4, offset = 0x4, fixed_abs, tag = 'smem constant byte address 0x4 - core index']
  #allocation1 [shape = 'u32[144,128]{1,0:T(1,128)}', space=vmem, size = 0x12000, scoped, tag = 'internal scratch']
  %s0 = inlined_call_operand.vmem [shape: bf16[8,32], index: 0, kind: input, shape index: {}]
  %s1 = inlined_call_operand.vmem [shape: bf16[8,32], index: 1, kind: input, shape index: {}]
  %s2 = inlined_call_operand.vmem [shape: bf16[8,16], index: 2, kind: input, shape index: {}]
  %s3 = inlined_call_operand.vmem [shape: f32[1,32], index: 3, kind: input, shape index: {}]
  %s4 = inlined_call_operand.vmem [shape: f32[1,32], index: 4, kind: input, shape index: {}]
  %s5 = inlined_call_operand.vmem [shape: f32[1,32], index: 5, kind: input, shape index: {}]
  %s6 = inlined_call_operand.vmem [shape: f32[1,32], index: 6, kind: input, shape index: {}]
  %s7 = inlined_call_operand.vmem [shape: bf16[64,96], index: 7, kind: input, shape index: {}]
  %s8 = inlined_call_operand.vmem [shape: f32[1,96], index: 8, kind: input, shape index: {}]
  %s9 = inlined_call_operand.vmem [shape: bf16[96,128], index: 9, kind: input, shape index: {}]
  %s10 = inlined_call_operand.vmem [shape: bf16[16,128], index: 10, kind: input, shape index: {}]
  %s11 = inlined_call_operand.vmem [shape: f32[1,128], index: 11, kind: input, shape index: {}]
  %s12 = inlined_call_operand.vmem [shape: bf16[128,128], index: 12, kind: input, shape index: {}]
  %s13 = inlined_call_operand.vmem [shape: f32[1,128], index: 13, kind: input, shape index: {}]
  %s14 = inlined_call_operand.hbm [shape: f32[8,128], index: 14, kind: output, shape index: {}]
  %s15 = sld [smem:[#allocation0]]
  $region66: #{output_layer.1} parent=0
    _
  %s17 = ssub.s32 1, %s15
  %s18 = scalar_select 0, %s17, %s15
  $region1: #{output_layer.1} parent=0
    #allocation2 [shape = 'u8[4096]{0}', space=vmem, size = 0x1000, scoped, tag = 'output window, operand 0, single buffered']
    #allocation3 [shape = 's32[1]{0}', space=sflag, size = 0x4, scoped, tag = 'scoped memory for output_layer.1']
    %19 = vsyncpa [#allocation3], 0
    // Predicated region
    $region2: #{output_layer.1} parent=1 // pred_check
      _
    $region3: #{output_layer.1} parent=1 // pred_check_branch
      %21 = sbr.rel (0) target = $region5
    $region4: #{output_layer.1} parent=1 // pred_region
      _
    $region5: #{output_layer.1} parent=1 // pred_fallthru
      _
    // Predicated region
    $region6: #{output_layer.1} parent=1 // pred_check
      _
    $region7: #{output_layer.1} parent=1 // pred_check_branch
      %23 = sbr.rel (0) target = $region9
    $region8: #{output_layer.1} parent=1 // pred_region
      _
    $region9: #{output_layer.1} parent=1 // pred_fallthru
      _
    // Predicated region
    $region10: #{output_layer.1} parent=1 // pred_check
      _
    $region11: #{output_layer.1} parent=1 // pred_check_branch
      %25 = sbr.rel (0) target = $region13
    $region12: #{output_layer.1} parent=1 // pred_region
      _
    $region13: #{output_layer.1} parent=1 // pred_fallthru
      _
    // Predicated region
    $region14: #{output_layer.1} parent=1 // pred_check
      _
    $region15: #{output_layer.1} parent=1 // pred_check_branch
      %27 = sbr.rel (0) target = $region17
    $region16: #{output_layer.1} parent=1 // pred_region
      _
    $region17: #{output_layer.1} parent=1 // pred_fallthru
      _
    // Predicated region
    $region18: #{output_layer.1} parent=1 // pred_check
      _
    $region19: #{output_layer.1} parent=1 // pred_check_branch
      %29 = sbr.rel (0) target = $region21
    $region20: #{output_layer.1} parent=1 // pred_region
      _
    $region21: #{output_layer.1} parent=1 // pred_fallthru
      _
    // Predicated region
    $region22: #{output_layer.1} parent=1 // pred_check
      _
    $region23: #{output_layer.1} parent=1 // pred_check_branch
      %31 = sbr.rel (0) target = $region25
    $region24: #{output_layer.1} parent=1 // pred_region
      _
    $region25: #{output_layer.1} parent=1 // pred_fallthru
      _
    // Predicated region
    $region26: #{output_layer.1} parent=1 // pred_check
      _
    $region27: #{output_layer.1} parent=1 // pred_check_branch
      %33 = sbr.rel (0) target = $region29
    $region28: #{output_layer.1} parent=1 // pred_region
      _
    $region29: #{output_layer.1} parent=1 // pred_fallthru
      _
    // Predicated region
    $region30: #{output_layer.1} parent=1 // pred_check
      _
    $region31: #{output_layer.1} parent=1 // pred_check_branch
      %35 = sbr.rel (0) target = $region33
    $region32: #{output_layer.1} parent=1 // pred_region
      _
    $region33: #{output_layer.1} parent=1 // pred_fallthru
      _
    // Predicated region
    $region34: #{output_layer.1} parent=1 // pred_check
      _
    $region35: #{output_layer.1} parent=1 // pred_check_branch
      %37 = sbr.rel (0) target = $region37
    $region36: #{output_layer.1} parent=1 // pred_region
      _
    $region37: #{output_layer.1} parent=1 // pred_fallthru
      _
    // Predicated region
    $region38: #{output_layer.1} parent=1 // pred_check
      _
    $region39: #{output_layer.1} parent=1 // pred_check_branch
      %39 = sbr.rel (0) target = $region41
    $region40: #{output_layer.1} parent=1 // pred_region
      _
    $region41: #{output_layer.1} parent=1 // pred_fallthru
      _
    // Predicated region
    $region42: #{output_layer.1} parent=1 // pred_check
      _
    $region43: #{output_layer.1} parent=1 // pred_check_branch
      %41 = sbr.rel (0) target = $region45
    $region44: #{output_layer.1} parent=1 // pred_region
      _
    $region45: #{output_layer.1} parent=1 // pred_fallthru
      _
    // Predicated region
    $region46: #{output_layer.1} parent=1 // pred_check
      _
    $region47: #{output_layer.1} parent=1 // pred_check_branch
      %43 = sbr.rel (0) target = $region49
    $region48: #{output_layer.1} parent=1 // pred_region
      _
    $region49: #{output_layer.1} parent=1 // pred_fallthru
      _
    // Predicated region
    $region50: #{output_layer.1} parent=1 // pred_check
      _
    $region51: #{output_layer.1} parent=1 // pred_check_branch
      %45 = sbr.rel (0) target = $region53
    $region52: #{output_layer.1} parent=1 // pred_region
      _
    $region53: #{output_layer.1} parent=1 // pred_fallthru
      _
    // Predicated region
    $region54: #{output_layer.1} parent=1 // pred_check
      _
    $region55: #{output_layer.1} parent=1 // pred_check_branch
      %47 = sbr.rel (0) target = $region57
    $region56: #{output_layer.1} parent=1 // pred_region
      _
    $region57: #{output_layer.1} parent=1 // pred_fallthru
      _
    %v49 = vld [vmem:[%s0] sm:$0xf]
    %v50 = vunpack.c.l.bf16 %v49
    %v51 = vld [vmem:[%s3] sm:$0x1]
    %v52 = vld [vmem:[%s4] sm:$0x1]
    %vm53 = vcmask 261120
    %v54 = vsel %vm53, %v50, 0.0
    %55 = vadd.xlane.f32.xlu0 %v54
    %v56 = vpop.xlane.xlu0 %55
    %v57 = vrcp.pop 32.0
    %v58 = vmul.f32 %v56, %v57
    %v59 = vmul.f32 %v50, %v50
    %v60 = vsel %vm53, %v59, 0.0
    %61 = vadd.xlane.f32.xlu0 %v60
    %v62 = vpop.xlane.xlu0 %61
    %v63 = vmul.f32 %v62, %v57
    %v64 = vmul.f32 %v58, %v58
    %v65 = vsub.f32 %v63, %v64
    %v66 = vmax.f32 %v65, 0.0
    %v67 = vsub.f32 %v50, %v58
    %v68 = vadd.f32 %v66, 1e-05
    %v69 = vrsqrt.pop %v68
    %v70 = vmul.f32 %v67, %v69
    %v72 = vlaneseq
    %v73 = vshrl.u32 %v72, 7
    %v74 = vsub.s32 0, %v73
    %v75 = vrot.slane %v51, %v74
    %v77 = vmul.f32 %v70, %v75
    %v79 = vlaneseq
    %v80 = vshrl.u32 %v79, 7
    %v81 = vsub.s32 0, %v80
    %v82 = vrot.slane %v52, %v81
    %v84 = vadd.f32 %v77, %v82
    %v85 = vld [vmem:[%s1] sm:$0xf]
    %v86 = vunpack.c.l.bf16 %v85
    %v87 = vld [vmem:[%s5] sm:$0x1]
    %v88 = vld [vmem:[%s6] sm:$0x1]
    %v89 = vsel %vm53, %v86, 0.0
    %90 = vadd.xlane.f32.xlu0 %v89
    %v91 = vpop.xlane.xlu0 %90
    %v92 = vmul.f32 %v91, %v57
    %v93 = vmul.f32 %v86, %v86
    %v94 = vsel %vm53, %v93, 0.0
    %95 = vadd.xlane.f32.xlu0 %v94
    %v96 = vpop.xlane.xlu0 %95
    %v97 = vmul.f32 %v96, %v57
    %v98 = vmul.f32 %v92, %v92
    %v99 = vsub.f32 %v97, %v98
    %v100 = vmax.f32 %v99, 0.0
    %v101 = vsub.f32 %v86, %v92
    %v102 = vadd.f32 %v100, 1e-05
    %v103 = vrsqrt.pop %v102
    %v104 = vmul.f32 %v101, %v103
    %v106 = vlaneseq
    %v107 = vshrl.u32 %v106, 7
    %v108 = vsub.s32 0, %v107
    %v109 = vrot.slane %v87, %v108
    %v111 = vmul.f32 %v104, %v109
    %v113 = vlaneseq
    %v114 = vshrl.u32 %v113, 7
    %v115 = vsub.s32 0, %v114
    %v116 = vrot.slane %v88, %v115
    %v118 = vadd.f32 %v111, %v116
    %120 = vrot.lane.b32.xlu0 %v118, 32
    %v121 = vpop.permute.xlu0 %120
    %v123 = vsel %vm53, %v84, %v121
    %v124 = vpack.c.bf16 %v123, %v123
    %v125 = vld [vmem:[%s7] sm:$0xf]
    %v126 = vld [vmem:[%s7 + $0x4] sm:$0xf]
    %v127 = vld [vmem:[%s7 + $0x8] sm:$0xf]
    %v128 = vld [vmem:[%s7 + $0xc] sm:$0xf]
    %v129 = vld [vmem:[%s7 + $0x10] sm:$0xf]
    %v130 = vld [vmem:[%s7 + $0x14] sm:$0xf]
    %v131 = vld [vmem:[%s7 + $0x18] sm:$0xf]
    %v132 = vld [vmem:[%s7 + $0x1c] sm:$0xf]
    %v133 = vld [vmem:[%s8] sm:$0x1]
    %v135 = vlaneseq
    %v136 = vshrl.u32 %v135, 7
    %v137 = vsub.s32 0, %v136
    %v138 = vrot.slane %v133, %v137
    %v148 = vunpack.c.l.b16 %v125
    %v149 = vunpack.c.l.b16 %v126
    %v150 = vunpack.c.l.b16 %v127
    %v151 = vunpack.c.l.b16 %v128
    %v152 = vunpack.c.l.b16 %v129
    %v153 = vunpack.c.l.b16 %v130
    %v154 = vunpack.c.l.b16 %v131
    %v155 = vunpack.c.l.b16 %v132
    %v156 = vpack.c.b16 %v149, %v148
    %v157 = vpack.c.b16 %v151, %v150
    %v158 = vpack.c.b16 %v153, %v152
    %v159 = vpack.c.b16 %v155, %v154
    %vm164 = vcmask 523264
    %v166 = vsel %vm164, %v124, 0
    %168 = vmatprep.subr.bf16.mxu0 0
    %169 = vmatpush1.bf16.msra.mxu0 %v156
    %170 = vmatprep.subr.bf16.mxu0 0
    %171 = vmatpush1.bf16.msra.mxu0 %v157
    %172 = vmatprep.subr.bf16.mxu0 0
    %173 = vmatpush1.bf16.msra.mxu0 %v158
    %174 = vmatprep.subr.bf16.mxu0 0
    %175 = vmatpush1.bf16.msra.mxu0 %v159
    %176 = vmatprep.subr.bf16.mxu0 0
    %177 = vmatpush1.bf16.msra.mxu0 0
    %178 = vmatprep.subr.bf16.mxu0 0
    %179 = vmatpush1.bf16.msra.mxu0 0
    %180 = vmatprep.subr.bf16.mxu0 0
    %181 = vmatpush1.bf16.msra.mxu0 0
    %182 = vmatprep.subr.bf16.mxu0 0
    %183 = vmatpush1.bf16.msra.mxu0 0
    %184 = vmatprep.subr.bf16.mxu0 0
    %185 = vmatpush1.bf16.msra.mxu0 0
    %186 = vmatprep.subr.bf16.mxu0 0
    %187 = vmatpush1.bf16.msra.mxu0 0
    %188 = vmatprep.subr.bf16.mxu0 0
    %189 = vmatpush1.bf16.msra.mxu0 0
    %190 = vmatprep.subr.bf16.mxu0 0
    %191 = vmatpush1.bf16.msra.mxu0 0
    %192 = vmatprep.subr.bf16.mxu0 0
    %193 = vmatpush1.bf16.msra.mxu0 0
    %194 = vmatprep.subr.bf16.mxu0 0
    %195 = vmatpush1.bf16.msra.mxu0 0
    %196 = vmatprep.subr.bf16.mxu0 0
    %197 = vmatpush1.bf16.msra.mxu0 0
    %198 = vmatprep.subr.bf16.mxu0 0
    %199 = vmatpush1.bf16.msra.mxu0 0
    %200 = vmatprep.mubr.bf16.mxu0 0
    %201 = vmatmul.mubr.bf16.gmra.mrb[0].mxu0 %v166
    %v202 = vpop.f32.mrb[0].mxu0
    %v203 = vadd.f32 %v138, %v202
    %v204 = vpop.f32.mrb[0].mxu0
    %v205 = vpop.f32.mrb[0].mxu0
    %v206 = vpop.f32.mrb[0].mxu0
    %207 = vdwg.mxu0
    %v208 = vmul.f32 %v203, 0.5
    %v209 = vmul.f32 %v203, 0.70710677
    %v210 = verf.f32.pop %v209
    %v211 = vadd.f32 %v210, 1.0
    %v212 = vmul.f32 %v208, %v211
    %v213 = vpack.c.bf16 %v212, %v212
    %v214 = vld [vmem:[%s9] sm:$0xf]
    %v215 = vld [vmem:[%s9 + $0x4] sm:$0xf]
    %v216 = vld [vmem:[%s9 + $0x8] sm:$0xf]
    %v217 = vld [vmem:[%s9 + $0xc] sm:$0xf]
    %v218 = vld [vmem:[%s9 + $0x10] sm:$0xf]
    %v219 = vld [vmem:[%s9 + $0x14] sm:$0xf]
    %v220 = vld [vmem:[%s9 + $0x18] sm:$0xf]
    %v221 = vld [vmem:[%s9 + $0x1c] sm:$0xf]
    %v222 = vld [vmem:[%s9 + $0x20] sm:$0xf]
    %v223 = vld [vmem:[%s9 + $0x24] sm:$0xf]
    %v224 = vld [vmem:[%s9 + $0x28] sm:$0xf]
    %v225 = vld [vmem:[%s9 + $0x2c] sm:$0xf]
    %v226 = vld [vmem:[%s2] sm:$0xf]
    %v227 = vld [vmem:[%s10] sm:$0xf]
    %v228 = vld [vmem:[%s10 + $0x4] sm:$0xf]
    %v231 = vunpack.c.l.b16 %v227
    %v232 = vunpack.c.l.b16 %v228
    %v233 = vpack.c.b16 %v232, %v231
    %vm235 = vcmask 130048
    %v237 = vsel %vm235, %v226, 0
    %239 = vmatprep.subr.bf16.mxu0 0
    %240 = vmatpush1.bf16.msra.mxu0 %v233
    %241 = vmatprep.subr.bf16.mxu0 0
    %242 = vmatpush1.bf16.msra.mxu0 0
    %243 = vmatprep.subr.bf16.mxu0 0
    %244 = vmatpush1.bf16.msra.mxu0 0
    %245 = vmatprep.subr.bf16.mxu0 0
    %246 = vmatpush1.bf16.msra.mxu0 0
    %247 = vmatprep.subr.bf16.mxu0 0
    %248 = vmatpush1.bf16.msra.mxu0 0
    %249 = vmatprep.subr.bf16.mxu0 0
    %250 = vmatpush1.bf16.msra.mxu0 0
    %251 = vmatprep.subr.bf16.mxu0 0
    %252 = vmatpush1.bf16.msra.mxu0 0
    %253 = vmatprep.subr.bf16.mxu0 0
    %254 = vmatpush1.bf16.msra.mxu0 0
    %255 = vmatprep.subr.bf16.mxu0 0
    %256 = vmatpush1.bf16.msra.mxu0 0
    %257 = vmatprep.subr.bf16.mxu0 0
    %258 = vmatpush1.bf16.msra.mxu0 0
    %259 = vmatprep.subr.bf16.mxu0 0
    %260 = vmatpush1.bf16.msra.mxu0 0
    %261 = vmatprep.subr.bf16.mxu0 0
    %262 = vmatpush1.bf16.msra.mxu0 0
    %263 = vmatprep.subr.bf16.mxu0 0
    %264 = vmatpush1.bf16.msra.mxu0 0
    %265 = vmatprep.subr.bf16.mxu0 0
    %266 = vmatpush1.bf16.msra.mxu0 0
    %267 = vmatprep.subr.bf16.mxu0 0
    %268 = vmatpush1.bf16.msra.mxu0 0
    %269 = vmatprep.subr.bf16.mxu0 0
    %270 = vmatpush1.bf16.msra.mxu0 0
    %271 = vmatprep.mubr.bf16.mxu0 0
    %272 = vmatmul.mubr.bf16.gmra.mrb[0].mxu0 %v237
    %v273 = vpop.f32.mrb[0].mxu0
    %v274 = vadd.f32 0.0, %v273
    %v275 = vpop.f32.mrb[0].mxu0
    %v276 = vpop.f32.mrb[0].mxu0
    %v277 = vpop.f32.mrb[0].mxu0
    %278 = vdwg.mxu0
    %v291 = vunpack.c.l.b16 %v214
    %v292 = vunpack.c.l.b16 %v215
    %v293 = vunpack.c.l.b16 %v216
    %v294 = vunpack.c.l.b16 %v217
    %v295 = vunpack.c.l.b16 %v218
    %v296 = vunpack.c.l.b16 %v219
    %v297 = vunpack.c.l.b16 %v220
    %v298 = vunpack.c.l.b16 %v221
    %v299 = vunpack.c.l.b16 %v222
    %v300 = vunpack.c.l.b16 %v223
    %v301 = vunpack.c.l.b16 %v224
    %v302 = vunpack.c.l.b16 %v225
    %v303 = vpack.c.b16 %v292, %v291
    %v304 = vpack.c.b16 %v294, %v293
    %v305 = vpack.c.b16 %v296, %v295
    %v306 = vpack.c.b16 %v298, %v297
    %v307 = vpack.c.b16 %v300, %v299
    %v308 = vpack.c.b16 %v302, %v301
    %vm315 = vcmask 785408
    %v317 = vsel %vm315, %v213, 0
    %319 = vmatprep.subr.bf16.mxu0 0
    %320 = vmatpush1.bf16.msra.mxu0 %v303
    %321 = vmatprep.subr.bf16.mxu0 0
    %322 = vmatpush1.bf16.msra.mxu0 %v304
    %323 = vmatprep.subr.bf16.mxu0 0
    %324 = vmatpush1.bf16.msra.mxu0 %v305
    %325 = vmatprep.subr.bf16.mxu0 0
    %326 = vmatpush1.bf16.msra.mxu0 %v306
    %327 = vmatprep.subr.bf16.mxu0 0
    %328 = vmatpush1.bf16.msra.mxu0 %v307
    %329 = vmatprep.subr.bf16.mxu0 0
    %330 = vmatpush1.bf16.msra.mxu0 %v308
    %331 = vmatprep.subr.bf16.mxu0 0
    %332 = vmatpush1.bf16.msra.mxu0 0
    %333 = vmatprep.subr.bf16.mxu0 0
    %334 = vmatpush1.bf16.msra.mxu0 0
    %335 = vmatprep.subr.bf16.mxu0 0
    %336 = vmatpush1.bf16.msra.mxu0 0
    %337 = vmatprep.subr.bf16.mxu0 0
    %338 = vmatpush1.bf16.msra.mxu0 0
    %339 = vmatprep.subr.bf16.mxu0 0
    %340 = vmatpush1.bf16.msra.mxu0 0
    %341 = vmatprep.subr.bf16.mxu0 0
    %342 = vmatpush1.bf16.msra.mxu0 0
    %343 = vmatprep.subr.bf16.mxu0 0
    %344 = vmatpush1.bf16.msra.mxu0 0
    %345 = vmatprep.subr.bf16.mxu0 0
    %346 = vmatpush1.bf16.msra.mxu0 0
    %347 = vmatprep.subr.bf16.mxu0 0
    %348 = vmatpush1.bf16.msra.mxu0 0
    %349 = vmatprep.subr.bf16.mxu0 0
    %350 = vmatpush1.bf16.msra.mxu0 0
    %351 = vmatprep.mubr.bf16.mxu0 0
    %352 = vmatmul.mubr.bf16.gmra.mrb[0].mxu0 %v317
    %v353 = vpop.f32.mrb[0].mxu0
    %v354 = vadd.f32 %v274, %v353
    %v355 = vpop.f32.mrb[0].mxu0
    %v356 = vpop.f32.mrb[0].mxu0
    %v357 = vpop.f32.mrb[0].mxu0
    %358 = vdwg.mxu0
    %v359 = vld [vmem:[%s11] sm:$0x1]
    %v361 = vlaneseq
    %v362 = vshrl.u32 %v361, 7
    %v363 = vsub.s32 0, %v362
    %v364 = vrot.slane %v359, %v363
    %v366 = vadd.f32 %v354, %v364
    %v367 = vmin.f32 %v366, 20.0
    %v368 = vmul.f32 %v367, 1.442695
    %v369 = vpow.pop %v368
    %v370 = vadd.f32 %v369, 1.0
    %v371 = vmul.f32 %v370, %v370
    %v372 = vadd.f32 %v371, 1.0
    %v373 = vrcp.pop %v372
    %v374 = vmul.f32 %v372, %v373
    %v375 = vsub.f32 2.0, %v374
    %v376 = vmul.f32 %v373, %v375
    %v377 = vmul.f32 %v372, %v376
    %v378 = vsub.f32 2.0, %v377
    %v379 = vmul.f32 %v376, %v378
    %v380 = vmul.f32 %v379, 2.0
    %v381 = vsub.f32 1.0, %v380
    %v382 = vmul.f32 %v366, %v381
    %vm383 = vcmp.gt.f32.partialorder %v366, 20.0
    %v384 = vsel %vm383, %v366, %v382
    %v385 = vpack.c.bf16 %v384, %v384
    %v386 = vld [vmem:[%s12] sm:$0xf]
    %v387 = vld [vmem:[%s12 + $0x4] sm:$0xf]
    %v388 = vld [vmem:[%s12 + $0x8] sm:$0xf]
    %v389 = vld [vmem:[%s12 + $0xc] sm:$0xf]
    %v390 = vld [vmem:[%s12 + $0x10] sm:$0xf]
    %v391 = vld [vmem:[%s12 + $0x14] sm:$0xf]
    %v392 = vld [vmem:[%s12 + $0x18] sm:$0xf]
    %v393 = vld [vmem:[%s12 + $0x1c] sm:$0xf]
    %v394 = vld [vmem:[%s12 + $0x20] sm:$0xf]
    %v395 = vld [vmem:[%s12 + $0x24] sm:$0xf]
    %v396 = vld [vmem:[%s12 + $0x28] sm:$0xf]
    %v397 = vld [vmem:[%s12 + $0x2c] sm:$0xf]
    %v398 = vld [vmem:[%s12 + $0x30] sm:$0xf]
    %v399 = vld [vmem:[%s12 + $0x34] sm:$0xf]
    %v400 = vld [vmem:[%s12 + $0x38] sm:$0xf]
    %v401 = vld [vmem:[%s12 + $0x3c] sm:$0xf]
    %v402 = vld [vmem:[%s13] sm:$0x1]
    %v404 = vlaneseq
    %v405 = vshrl.u32 %v404, 7
    %v406 = vsub.s32 0, %v405
    %v407 = vrot.slane %v402, %v406
    %v425 = vunpack.c.l.b16 %v386
    %v426 = vunpack.c.l.b16 %v387
    %v427 = vunpack.c.l.b16 %v388
    %v428 = vunpack.c.l.b16 %v389
    %v429 = vunpack.c.l.b16 %v390
    %v430 = vunpack.c.l.b16 %v391
    %v431 = vunpack.c.l.b16 %v392
    %v432 = vunpack.c.l.b16 %v393
    %v433 = vunpack.c.l.b16 %v394
    %v434 = vunpack.c.l.b16 %v395
    %v435 = vunpack.c.l.b16 %v396
    %v436 = vunpack.c.l.b16 %v397
    %v437 = vunpack.c.l.b16 %v398
    %v438 = vunpack.c.l.b16 %v399
    %v439 = vunpack.c.l.b16 %v400
    %v440 = vunpack.c.l.b16 %v401
    %v441 = vpack.c.b16 %v426, %v425
    %v442 = vpack.c.b16 %v428, %v427
    %v443 = vpack.c.b16 %v430, %v429
    %v444 = vpack.c.b16 %v432, %v431
    %v445 = vpack.c.b16 %v434, %v433
    %v446 = vpack.c.b16 %v436, %v435
    %v447 = vpack.c.b16 %v438, %v437
    %v448 = vpack.c.b16 %v440, %v439
    %457 = vmatprep.subr.bf16.mxu0 0
    %458 = vmatpush1.bf16.msra.mxu0 %v441
    %459 = vmatprep.subr.bf16.mxu0 0
    %460 = vmatpush1.bf16.msra.mxu0 %v442
    %461 = vmatprep.subr.bf16.mxu0 0
    %462 = vmatpush1.bf16.msra.mxu0 %v443
    %463 = vmatprep.subr.bf16.mxu0 0
    %464 = vmatpush1.bf16.msra.mxu0 %v444
    %465 = vmatprep.subr.bf16.mxu0 0
    %466 = vmatpush1.bf16.msra.mxu0 %v445
    %467 = vmatprep.subr.bf16.mxu0 0
    %468 = vmatpush1.bf16.msra.mxu0 %v446
    %469 = vmatprep.subr.bf16.mxu0 0
    %470 = vmatpush1.bf16.msra.mxu0 %v447
    %471 = vmatprep.subr.bf16.mxu0 0
    %472 = vmatpush1.bf16.msra.mxu0 %v448
    %473 = vmatprep.subr.bf16.mxu0 0
    %474 = vmatpush1.bf16.msra.mxu0 0
    %475 = vmatprep.subr.bf16.mxu0 0
    %476 = vmatpush1.bf16.msra.mxu0 0
    %477 = vmatprep.subr.bf16.mxu0 0
    %478 = vmatpush1.bf16.msra.mxu0 0
    %479 = vmatprep.subr.bf16.mxu0 0
    %480 = vmatpush1.bf16.msra.mxu0 0
    %481 = vmatprep.subr.bf16.mxu0 0
    %482 = vmatpush1.bf16.msra.mxu0 0
    %483 = vmatprep.subr.bf16.mxu0 0
    %484 = vmatpush1.bf16.msra.mxu0 0
    %485 = vmatprep.subr.bf16.mxu0 0
    %486 = vmatpush1.bf16.msra.mxu0 0
    %487 = vmatprep.subr.bf16.mxu0 0
    %488 = vmatpush1.bf16.msra.mxu0 0
    %489 = vmatprep.mubr.bf16.mxu0 0
    %490 = vmatmul.mubr.bf16.gmra.mrb[0].mxu0 %v385
    %v491 = vpop.f32.mrb[0].mxu0
    %v492 = vadd.f32 %v407, %v491
    %v493 = vpop.f32.mrb[0].mxu0
    %v494 = vpop.f32.mrb[0].mxu0
    %v495 = vpop.f32.mrb[0].mxu0
    %496 = vdwg.mxu0
    %497 = vst [vmem:[#allocation2] sm:$0xff] %v492
    // Predicated region
    $region58: #{output_layer.1} parent=1 // pred_check
      _
    $region59: #{output_layer.1} parent=1 // pred_check_branch
      %499 = sbr.rel (0) target = $region61
    $region60: #{output_layer.1} parent=1 // pred_region
      %s501 = ssub.s32 128, 128
      %502 = vsyncadd [#allocation3], %s501
      %s504 = sshll.u32 [#allocation2], 4
      %s505 = int_to_ptr.vmem [resolvable:$true] %s504
      %507 = dma.vmem_to_hbm [thread:$0]  %s505, 128, %s14, [#allocation3]
    $region61: #{output_layer.1} parent=1 // pred_fallthru
      _
    // Predicated region
    $region62: #{output_layer.1} parent=1 // pred_check
      _
    $region63: #{output_layer.1} parent=1 // pred_check_branch
      %509 = sbr.rel (0) target = $region65
    $region64: #{output_layer.1} parent=1 // pred_region
      %510 = dma.done [#allocation3], 128
    $region65: #{output_layer.1} parent=1 // pred_fallthru
      _
    %511 = vsyncpa [#allocation3], 1

// kernel: output_layer.1
$region0: #{output_layer.1}
  #allocation0 [shape = 'u32[]', space=smem, size = 0x4, offset = 0x4, fixed_abs, tag = 'smem constant byte address 0x4 - core index']
  #allocation1 [shape = 'u32[144,128]{1,0:T(1,128)}', space=vmem, size = 0x12000, scoped, tag = 'internal scratch']
  %s0 = inlined_call_operand.vmem [shape: bf16[8,32], index: 0, kind: input, shape index: {}]
  %s1 = inlined_call_operand.vmem [shape: bf16[8,32], index: 1, kind: input, shape index: {}]
  %s2 = inlined_call_operand.vmem [shape: bf16[8,16], index: 2, kind: input, shape index: {}]
  %s3 = inlined_call_operand.vmem [shape: f32[1,32], index: 3, kind: input, shape index: {}]
  %s4 = inlined_call_operand.vmem [shape: f32[1,32], index: 4, kind: input, shape index: {}]
  %s5 = inlined_call_operand.vmem [shape: f32[1,32], index: 5, kind: input, shape index: {}]
  %s6 = inlined_call_operand.vmem [shape: f32[1,32], index: 6, kind: input, shape index: {}]
  %s7 = inlined_call_operand.vmem [shape: bf16[64,96], index: 7, kind: input, shape index: {}]
  %s8 = inlined_call_operand.vmem [shape: f32[1,96], index: 8, kind: input, shape index: {}]
  %s9 = inlined_call_operand.vmem [shape: bf16[96,128], index: 9, kind: input, shape index: {}]
  %s10 = inlined_call_operand.vmem [shape: bf16[16,128], index: 10, kind: input, shape index: {}]
  %s11 = inlined_call_operand.vmem [shape: f32[1,128], index: 11, kind: input, shape index: {}]
  %s12 = inlined_call_operand.vmem [shape: bf16[128,128], index: 12, kind: input, shape index: {}]
  %s13 = inlined_call_operand.vmem [shape: f32[1,128], index: 13, kind: input, shape index: {}]
  %s14 = inlined_call_operand.hbm [shape: f32[8,128], index: 14, kind: output, shape index: {}]
  %s15 = sld [smem:[#allocation0]]
  $region66: #{output_layer.1} parent=0
    _
  %s17 = ssub.s32 1, %s15
  %s18 = scalar_select 0, %s17, %s15
  $region1: #{output_layer.1} parent=0
    #allocation2 [shape = 'u8[4096]{0}', space=vmem, size = 0x1000, scoped, tag = 'output window, operand 0, single buffered']
    #allocation3 [shape = 's32[1]{0}', space=sflag, size = 0x4, scoped, tag = 'scoped memory for output_layer.1']
    %19 = vsyncpa [#allocation3], 0
    // Predicated region
    $region2: #{output_layer.1} parent=1 // pred_check
      _
    $region3: #{output_layer.1} parent=1 // pred_check_branch
      %21 = sbr.rel (0) target = $region5
    $region4: #{output_layer.1} parent=1 // pred_region
      _
    $region5: #{output_layer.1} parent=1 // pred_fallthru
      _
    // Predicated region
    $region6: #{output_layer.1} parent=1 // pred_check
      _
    $region7: #{output_layer.1} parent=1 // pred_check_branch
      %23 = sbr.rel (0) target = $region9
    $region8: #{output_layer.1} parent=1 // pred_region
      _
    $region9: #{output_layer.1} parent=1 // pred_fallthru
      _
    // Predicated region
    $region10: #{output_layer.1} parent=1 // pred_check
      _
    $region11: #{output_layer.1} parent=1 // pred_check_branch
      %25 = sbr.rel (0) target = $region13
    $region12: #{output_layer.1} parent=1 // pred_region
      _
    $region13: #{output_layer.1} parent=1 // pred_fallthru
      _
    // Predicated region
    $region14: #{output_layer.1} parent=1 // pred_check
      _
    $region15: #{output_layer.1} parent=1 // pred_check_branch
      %27 = sbr.rel (0) target = $region17
    $region16: #{output_layer.1} parent=1 // pred_region
      _
    $region17: #{output_layer.1} parent=1 // pred_fallthru
      _
    // Predicated region
    $region18: #{output_layer.1} parent=1 // pred_check
      _
    $region19: #{output_layer.1} parent=1 // pred_check_branch
      %29 = sbr.rel (0) target = $region21
    $region20: #{output_layer.1} parent=1 // pred_region
      _
    $region21: #{output_layer.1} parent=1 // pred_fallthru
      _
    // Predicated region
    $region22: #{output_layer.1} parent=1 // pred_check
      _
    $region23: #{output_layer.1} parent=1 // pred_check_branch
      %31 = sbr.rel (0) target = $region25
    $region24: #{output_layer.1} parent=1 // pred_region
      _
    $region25: #{output_layer.1} parent=1 // pred_fallthru
      _
    // Predicated region
    $region26: #{output_layer.1} parent=1 // pred_check
      _
    $region27: #{output_layer.1} parent=1 // pred_check_branch
      %33 = sbr.rel (0) target = $region29
    $region28: #{output_layer.1} parent=1 // pred_region
      _
    $region29: #{output_layer.1} parent=1 // pred_fallthru
      _
    // Predicated region
    $region30: #{output_layer.1} parent=1 // pred_check
      _
    $region31: #{output_layer.1} parent=1 // pred_check_branch
      %35 = sbr.rel (0) target = $region33
    $region32: #{output_layer.1} parent=1 // pred_region
      _
    $region33: #{output_layer.1} parent=1 // pred_fallthru
      _
    // Predicated region
    $region34: #{output_layer.1} parent=1 // pred_check
      _
    $region35: #{output_layer.1} parent=1 // pred_check_branch
      %37 = sbr.rel (0) target = $region37
    $region36: #{output_layer.1} parent=1 // pred_region
      _
    $region37: #{output_layer.1} parent=1 // pred_fallthru
      _
    // Predicated region
    $region38: #{output_layer.1} parent=1 // pred_check
      _
    $region39: #{output_layer.1} parent=1 // pred_check_branch
      %39 = sbr.rel (0) target = $region41
    $region40: #{output_layer.1} parent=1 // pred_region
      _
    $region41: #{output_layer.1} parent=1 // pred_fallthru
      _
    // Predicated region
    $region42: #{output_layer.1} parent=1 // pred_check
      _
    $region43: #{output_layer.1} parent=1 // pred_check_branch
      %41 = sbr.rel (0) target = $region45
    $region44: #{output_layer.1} parent=1 // pred_region
      _
    $region45: #{output_layer.1} parent=1 // pred_fallthru
      _
    // Predicated region
    $region46: #{output_layer.1} parent=1 // pred_check
      _
    $region47: #{output_layer.1} parent=1 // pred_check_branch
      %43 = sbr.rel (0) target = $region49
    $region48: #{output_layer.1} parent=1 // pred_region
      _
    $region49: #{output_layer.1} parent=1 // pred_fallthru
      _
    // Predicated region
    $region50: #{output_layer.1} parent=1 // pred_check
      _
    $region51: #{output_layer.1} parent=1 // pred_check_branch
      %45 = sbr.rel (0) target = $region53
    $region52: #{output_layer.1} parent=1 // pred_region
      _
    $region53: #{output_layer.1} parent=1 // pred_fallthru
      _
    // Predicated region
    $region54: #{output_layer.1} parent=1 // pred_check
      _
    $region55: #{output_layer.1} parent=1 // pred_check_branch
      %47 = sbr.rel (0) target = $region57
    $region56: #{output_layer.1} parent=1 // pred_region
      _
    $region57: #{output_layer.1} parent=1 // pred_fallthru
      _
    %v49 = vld [vmem:[%s0] sm:$0xf]
    %v50 = vunpack.c.l.bf16 %v49
    %v51 = vld [vmem:[%s3] sm:$0x1]
    %v52 = vld [vmem:[%s4] sm:$0x1]
    %vm53 = vcmask 261120
    %v54 = vsel %vm53, %v50, 0.0
    %55 = vadd.xlane.f32.xlu0 %v54
    %v56 = vpop.xlane.xlu0 %55
    %v57 = vrcp.pop 32.0
    %v58 = vmul.f32 %v56, %v57
    %v59 = vmul.f32 %v50, %v50
    %v60 = vsel %vm53, %v59, 0.0
    %61 = vadd.xlane.f32.xlu0 %v60
    %v62 = vpop.xlane.xlu0 %61
    %v63 = vmul.f32 %v62, %v57
    %v64 = vmul.f32 %v58, %v58
    %v65 = vsub.f32 %v63, %v64
    %v66 = vmax.f32 %v65, 0.0
    %v67 = vsub.f32 %v50, %v58
    %v68 = vadd.f32 %v66, 1e-05
    %v69 = vrsqrt.pop %v68
    %v70 = vmul.f32 %v67, %v69
    %v72 = vlaneseq
    %v73 = vshrl.u32 %v72, 7
    %v74 = vsub.s32 0, %v73
    %v75 = vrot.slane %v51, %v74
    %v77 = vmul.f32 %v70, %v75
    %v79 = vlaneseq
    %v80 = vshrl.u32 %v79, 7
    %v81 = vsub.s32 0, %v80
    %v82 = vrot.slane %v52, %v81
    %v84 = vadd.f32 %v77, %v82
    %v85 = vld [vmem:[%s1] sm:$0xf]
    %v86 = vunpack.c.l.bf16 %v85
    %v87 = vld [vmem:[%s5] sm:$0x1]
    %v88 = vld [vmem:[%s6] sm:$0x1]
    %v89 = vsel %vm53, %v86, 0.0
    %90 = vadd.xlane.f32.xlu0 %v89
    %v91 = vpop.xlane.xlu0 %90
    %v92 = vmul.f32 %v91, %v57
    %v93 = vmul.f32 %v86, %v86
    %v94 = vsel %vm53, %v93, 0.0
    %95 = vadd.xlane.f32.xlu0 %v94
    %v96 = vpop.xlane.xlu0 %95
    %v97 = vmul.f32 %v96, %v57
    %v98 = vmul.f32 %v92, %v92
    %v99 = vsub.f32 %v97, %v98
    %v100 = vmax.f32 %v99, 0.0
    %v101 = vsub.f32 %v86, %v92
    %v102 = vadd.f32 %v100, 1e-05
    %v103 = vrsqrt.pop %v102
    %v104 = vmul.f32 %v101, %v103
    %v106 = vlaneseq
    %v107 = vshrl.u32 %v106, 7
    %v108 = vsub.s32 0, %v107
    %v109 = vrot.slane %v87, %v108
    %v111 = vmul.f32 %v104, %v109
    %v113 = vlaneseq
    %v114 = vshrl.u32 %v113, 7
    %v115 = vsub.s32 0, %v114
    %v116 = vrot.slane %v88, %v115
    %v118 = vadd.f32 %v111, %v116
    %120 = vrot.lane.b32.xlu0 %v118, 32
    %v121 = vpop.permute.xlu0 %120
    %v123 = vsel %vm53, %v84, %v121
    %v124 = vpack.c.bf16 %v123, %v123
    %v125 = vld [vmem:[%s7] sm:$0xf]
    %v126 = vld [vmem:[%s7 + $0x4] sm:$0xf]
    %v127 = vld [vmem:[%s7 + $0x8] sm:$0xf]
    %v128 = vld [vmem:[%s7 + $0xc] sm:$0xf]
    %v129 = vld [vmem:[%s7 + $0x10] sm:$0xf]
    %v130 = vld [vmem:[%s7 + $0x14] sm:$0xf]
    %v131 = vld [vmem:[%s7 + $0x18] sm:$0xf]
    %v132 = vld [vmem:[%s7 + $0x1c] sm:$0xf]
    %v133 = vld [vmem:[%s8] sm:$0x1]
    %v135 = vlaneseq
    %v136 = vshrl.u32 %v135, 7
    %v137 = vsub.s32 0, %v136
    %v138 = vrot.slane %v133, %v137
    %v148 = vunpack.c.l.b16 %v125
    %v149 = vunpack.c.l.b16 %v126
    %v150 = vunpack.c.l.b16 %v127
    %v151 = vunpack.c.l.b16 %v128
    %v152 = vunpack.c.l.b16 %v129
    %v153 = vunpack.c.l.b16 %v130
    %v154 = vunpack.c.l.b16 %v131
    %v155 = vunpack.c.l.b16 %v132
    %v156 = vpack.c.b16 %v149, %v148
    %v157 = vpack.c.b16 %v151, %v150
    %v158 = vpack.c.b16 %v153, %v152
    %v159 = vpack.c.b16 %v155, %v154
    %vm164 = vcmask 523264
    %v166 = vsel %vm164, %v124, 0
    %168 = vmatprep.subr.bf16.mxu0 0
    %169 = vmatpush1.bf16.msra.mxu0 %v156
    %170 = vmatprep.subr.bf16.mxu0 0
    %171 = vmatpush1.bf16.msra.mxu0 %v157
    %172 = vmatprep.subr.bf16.mxu0 0
    %173 = vmatpush1.bf16.msra.mxu0 %v158
    %174 = vmatprep.subr.bf16.mxu0 0
    %175 = vmatpush1.bf16.msra.mxu0 %v159
    %176 = vmatprep.subr.bf16.mxu0 0
    %177 = vmatpush1.bf16.msra.mxu0 0
    %178 = vmatprep.subr.bf16.mxu0 0
    %179 = vmatpush1.bf16.msra.mxu0 0
    %180 = vmatprep.subr.bf16.mxu0 0
    %181 = vmatpush1.bf16.msra.mxu0 0
    %182 = vmatprep.subr.bf16.mxu0 0
    %183 = vmatpush1.bf16.msra.mxu0 0
    %184 = vmatprep.subr.bf16.mxu0 0
    %185 = vmatpush1.bf16.msra.mxu0 0
    %186 = vmatprep.subr.bf16.mxu0 0
    %187 = vmatpush1.bf16.msra.mxu0 0
    %188 = vmatprep.subr.bf16.mxu0 0
    %189 = vmatpush1.bf16.msra.mxu0 0
    %190 = vmatprep.subr.bf16.mxu0 0
    %191 = vmatpush1.bf16.msra.mxu0 0
    %192 = vmatprep.subr.bf16.mxu0 0
    %193 = vmatpush1.bf16.msra.mxu0 0
    %194 = vmatprep.subr.bf16.mxu0 0
    %195 = vmatpush1.bf16.msra.mxu0 0
    %196 = vmatprep.subr.bf16.mxu0 0
    %197 = vmatpush1.bf16.msra.mxu0 0
    %198 = vmatprep.subr.bf16.mxu0 0
    %199 = vmatpush1.bf16.msra.mxu0 0
    %200 = vmatprep.mubr.bf16.mxu0 0
    %201 = vmatmul.mubr.bf16.gmra.mrb[0].mxu0 %v166
    %v202 = vpop.f32.mrb[0].mxu0
    %v203 = vadd.f32 %v138, %v202
    %v204 = vpop.f32.mrb[0].mxu0
    %v205 = vpop.f32.mrb[0].mxu0
    %v206 = vpop.f32.mrb[0].mxu0
    %207 = vdwg.mxu0
    %v208 = vmul.f32 %v203, 0.5
    %v209 = vmul.f32 %v203, 0.70710677
    %v210 = verf.f32.pop %v209
    %v211 = vadd.f32 %v210, 1.0
    %v212 = vmul.f32 %v208, %v211
    %v213 = vpack.c.bf16 %v212, %v212
    %v214 = vld [vmem:[%s9] sm:$0xf]
    %v215 = vld [vmem:[%s9 + $0x4] sm:$0xf]
    %v216 = vld [vmem:[%s9 + $0x8] sm:$0xf]
    %v217 = vld [vmem:[%s9 + $0xc] sm:$0xf]
    %v218 = vld [vmem:[%s9 + $0x10] sm:$0xf]
    %v219 = vld [vmem:[%s9 + $0x14] sm:$0xf]
    %v220 = vld [vmem:[%s9 + $0x18] sm:$0xf]
    %v221 = vld [vmem:[%s9 + $0x1c] sm:$0xf]
    %v222 = vld [vmem:[%s9 + $0x20] sm:$0xf]
    %v223 = vld [vmem:[%s9 + $0x24] sm:$0xf]
    %v224 = vld [vmem:[%s9 + $0x28] sm:$0xf]
    %v225 = vld [vmem:[%s9 + $0x2c] sm:$0xf]
    %v226 = vld [vmem:[%s2] sm:$0xf]
    %v227 = vld [vmem:[%s10] sm:$0xf]
    %v228 = vld [vmem:[%s10 + $0x4] sm:$0xf]
    %v231 = vunpack.c.l.b16 %v227
    %v232 = vunpack.c.l.b16 %v228
    %v233 = vpack.c.b16 %v232, %v231
    %vm235 = vcmask 130048
    %v237 = vsel %vm235, %v226, 0
    %239 = vmatprep.subr.bf16.mxu0 0
    %240 = vmatpush1.bf16.msra.mxu0 %v233
    %241 = vmatprep.subr.bf16.mxu0 0
    %242 = vmatpush1.bf16.msra.mxu0 0
    %243 = vmatprep.subr.bf16.mxu0 0
    %244 = vmatpush1.bf16.msra.mxu0 0
    %245 = vmatprep.subr.bf16.mxu0 0
    %246 = vmatpush1.bf16.msra.mxu0 0
    %247 = vmatprep.subr.bf16.mxu0 0
    %248 = vmatpush1.bf16.msra.mxu0 0
    %249 = vmatprep.subr.bf16.mxu0 0
    %250 = vmatpush1.bf16.msra.mxu0 0
    %251 = vmatprep.subr.bf16.mxu0 0
    %252 = vmatpush1.bf16.msra.mxu0 0
    %253 = vmatprep.subr.bf16.mxu0 0
    %254 = vmatpush1.bf16.msra.mxu0 0
    %255 = vmatprep.subr.bf16.mxu0 0
    %256 = vmatpush1.bf16.msra.mxu0 0
    %257 = vmatprep.subr.bf16.mxu0 0
    %258 = vmatpush1.bf16.msra.mxu0 0
    %259 = vmatprep.subr.bf16.mxu0 0
    %260 = vmatpush1.bf16.msra.mxu0 0
    %261 = vmatprep.subr.bf16.mxu0 0
    %262 = vmatpush1.bf16.msra.mxu0 0
    %263 = vmatprep.subr.bf16.mxu0 0
    %264 = vmatpush1.bf16.msra.mxu0 0
    %265 = vmatprep.subr.bf16.mxu0 0
    %266 = vmatpush1.bf16.msra.mxu0 0
    %267 = vmatprep.subr.bf16.mxu0 0
    %268 = vmatpush1.bf16.msra.mxu0 0
    %269 = vmatprep.subr.bf16.mxu0 0
    %270 = vmatpush1.bf16.msra.mxu0 0
    %271 = vmatprep.mubr.bf16.mxu0 0
    %272 = vmatmul.mubr.bf16.gmra.mrb[0].mxu0 %v237
    %v273 = vpop.f32.mrb[0].mxu0
    %v274 = vadd.f32 0.0, %v273
    %v275 = vpop.f32.mrb[0].mxu0
    %v276 = vpop.f32.mrb[0].mxu0
    %v277 = vpop.f32.mrb[0].mxu0
    %278 = vdwg.mxu0
    %v291 = vunpack.c.l.b16 %v214
    %v292 = vunpack.c.l.b16 %v215
    %v293 = vunpack.c.l.b16 %v216
    %v294 = vunpack.c.l.b16 %v217
    %v295 = vunpack.c.l.b16 %v218
    %v296 = vunpack.c.l.b16 %v219
    %v297 = vunpack.c.l.b16 %v220
    %v298 = vunpack.c.l.b16 %v221
    %v299 = vunpack.c.l.b16 %v222
    %v300 = vunpack.c.l.b16 %v223
    %v301 = vunpack.c.l.b16 %v224
    %v302 = vunpack.c.l.b16 %v225
    %v303 = vpack.c.b16 %v292, %v291
    %v304 = vpack.c.b16 %v294, %v293
    %v305 = vpack.c.b16 %v296, %v295
    %v306 = vpack.c.b16 %v298, %v297
    %v307 = vpack.c.b16 %v300, %v299
    %v308 = vpack.c.b16 %v302, %v301
    %vm315 = vcmask 785408
    %v317 = vsel %vm315, %v213, 0
    %319 = vmatprep.subr.bf16.mxu0 0
    %320 = vmatpush1.bf16.msra.mxu0 %v303
    %321 = vmatprep.subr.bf16.mxu0 0
    %322 = vmatpush1.bf16.msra.mxu0 %v304
    %323 = vmatprep.subr.bf16.mxu0 0
    %324 = vmatpush1.bf16.msra.mxu0 %v305
    %325 = vmatprep.subr.bf16.mxu0 0
    %326 = vmatpush1.bf16.msra.mxu0 %v306
    %327 = vmatprep.subr.bf16.mxu0 0
    %328 = vmatpush1.bf16.msra.mxu0 %v307
    %329 = vmatprep.subr.bf16.mxu0 0
    %330 = vmatpush1.bf16.msra.mxu0 %v308
    %331 = vmatprep.subr.bf16.mxu0 0
    %332 = vmatpush1.bf16.msra.mxu0 0
    %333 = vmatprep.subr.bf16.mxu0 0
    %334 = vmatpush1.bf16.msra.mxu0 0
    %335 = vmatprep.subr.bf16.mxu0 0
    %336 = vmatpush1.bf16.msra.mxu0 0
    %337 = vmatprep.subr.bf16.mxu0 0
    %338 = vmatpush1.bf16.msra.mxu0 0
    %339 = vmatprep.subr.bf16.mxu0 0
    %340 = vmatpush1.bf16.msra.mxu0 0
    %341 = vmatprep.subr.bf16.mxu0 0
    %342 = vmatpush1.bf16.msra.mxu0 0
    %343 = vmatprep.subr.bf16.mxu0 0
    %344 = vmatpush1.bf16.msra.mxu0 0
    %345 = vmatprep.subr.bf16.mxu0 0
    %346 = vmatpush1.bf16.msra.mxu0 0
    %347 = vmatprep.subr.bf16.mxu0 0
    %348 = vmatpush1.bf16.msra.mxu0 0
    %349 = vmatprep.subr.bf16.mxu0 0
    %350 = vmatpush1.bf16.msra.mxu0 0
    %351 = vmatprep.mubr.bf16.mxu0 0
    %352 = vmatmul.mubr.bf16.gmra.mrb[0].mxu0 %v317
    %v353 = vpop.f32.mrb[0].mxu0
    %v354 = vadd.f32 %v274, %v353
    %v355 = vpop.f32.mrb[0].mxu0
    %v356 = vpop.f32.mrb[0].mxu0
    %v357 = vpop.f32.mrb[0].mxu0
    %358 = vdwg.mxu0
    %v359 = vld [vmem:[%s11] sm:$0x1]
    %v361 = vlaneseq
    %v362 = vshrl.u32 %v361, 7
    %v363 = vsub.s32 0, %v362
    %v364 = vrot.slane %v359, %v363
    %v366 = vadd.f32 %v354, %v364
    %v367 = vmin.f32 %v366, 20.0
    %v368 = vmul.f32 %v367, 1.442695
    %v369 = vpow.pop %v368
    %v370 = vadd.f32 %v369, 1.0
    %v371 = vmul.f32 %v370, %v370
    %v372 = vadd.f32 %v371, 1.0
    %v373 = vrcp.pop %v372
    %v374 = vmul.f32 %v372, %v373
    %v375 = vsub.f32 2.0, %v374
    %v376 = vmul.f32 %v373, %v375
    %v377 = vmul.f32 %v372, %v376
    %v378 = vsub.f32 2.0, %v377
    %v379 = vmul.f32 %v376, %v378
    %v380 = vmul.f32 %v379, 2.0
    %v381 = vsub.f32 1.0, %v380
    %v382 = vmul.f32 %v366, %v381
    %vm383 = vcmp.gt.f32.partialorder %v366, 20.0
    %v384 = vsel %vm383, %v366, %v382
    %v385 = vpack.c.bf16 %v384, %v384
    %v386 = vld [vmem:[%s12] sm:$0xf]
    %v387 = vld [vmem:[%s12 + $0x4] sm:$0xf]
    %v388 = vld [vmem:[%s12 + $0x8] sm:$0xf]
    %v389 = vld [vmem:[%s12 + $0xc] sm:$0xf]
    %v390 = vld [vmem:[%s12 + $0x10] sm:$0xf]
    %v391 = vld [vmem:[%s12 + $0x14] sm:$0xf]
    %v392 = vld [vmem:[%s12 + $0x18] sm:$0xf]
    %v393 = vld [vmem:[%s12 + $0x1c] sm:$0xf]
    %v394 = vld [vmem:[%s12 + $0x20] sm:$0xf]
    %v395 = vld [vmem:[%s12 + $0x24] sm:$0xf]
    %v396 = vld [vmem:[%s12 + $0x28] sm:$0xf]
    %v397 = vld [vmem:[%s12 + $0x2c] sm:$0xf]
    %v398 = vld [vmem:[%s12 + $0x30] sm:$0xf]
    %v399 = vld [vmem:[%s12 + $0x34] sm:$0xf]
    %v400 = vld [vmem:[%s12 + $0x38] sm:$0xf]
    %v401 = vld [vmem:[%s12 + $0x3c] sm:$0xf]
    %v402 = vld [vmem:[%s13] sm:$0x1]
    %v404 = vlaneseq
    %v405 = vshrl.u32 %v404, 7
    %v406 = vsub.s32 0, %v405
    %v407 = vrot.slane %v402, %v406
    %v425 = vunpack.c.l.b16 %v386
    %v426 = vunpack.c.l.b16 %v387
    %v427 = vunpack.c.l.b16 %v388
    %v428 = vunpack.c.l.b16 %v389
    %v429 = vunpack.c.l.b16 %v390
    %v430 = vunpack.c.l.b16 %v391
    %v431 = vunpack.c.l.b16 %v392
    %v432 = vunpack.c.l.b16 %v393
    %v433 = vunpack.c.l.b16 %v394
    %v434 = vunpack.c.l.b16 %v395
    %v435 = vunpack.c.l.b16 %v396
    %v436 = vunpack.c.l.b16 %v397
    %v437 = vunpack.c.l.b16 %v398
    %v438 = vunpack.c.l.b16 %v399
    %v439 = vunpack.c.l.b16 %v400
    %v440 = vunpack.c.l.b16 %v401
    %v441 = vpack.c.b16 %v426, %v425
    %v442 = vpack.c.b16 %v428, %v427
    %v443 = vpack.c.b16 %v430, %v429
    %v444 = vpack.c.b16 %v432, %v431
    %v445 = vpack.c.b16 %v434, %v433
    %v446 = vpack.c.b16 %v436, %v435
    %v447 = vpack.c.b16 %v438, %v437
    %v448 = vpack.c.b16 %v440, %v439
    %457 = vmatprep.subr.bf16.mxu0 0
    %458 = vmatpush1.bf16.msra.mxu0 %v441
    %459 = vmatprep.subr.bf16.mxu0 0
    %460 = vmatpush1.bf16.msra.mxu0 %v442
    %461 = vmatprep.subr.bf16.mxu0 0
    %462 = vmatpush1.bf16.msra.mxu0 %v443
    %463 = vmatprep.subr.bf16.mxu0 0
    %464 = vmatpush1.bf16.msra.mxu0 %v444
    %465 = vmatprep.subr.bf16.mxu0 0
    %466 = vmatpush1.bf16.msra.mxu0 %v445
    %467 = vmatprep.subr.bf16.mxu0 0
    %468 = vmatpush1.bf16.msra.mxu0 %v446
    %469 = vmatprep.subr.bf16.mxu0 0
    %470 = vmatpush1.bf16.msra.mxu0 %v447
    %471 = vmatprep.subr.bf16.mxu0 0
    %472 = vmatpush1.bf16.msra.mxu0 %v448
    %473 = vmatprep.subr.bf16.mxu0 0
    %474 = vmatpush1.bf16.msra.mxu0 0
    %475 = vmatprep.subr.bf16.mxu0 0
    %476 = vmatpush1.bf16.msra.mxu0 0
    %477 = vmatprep.subr.bf16.mxu0 0
    %478 = vmatpush1.bf16.msra.mxu0 0
    %479 = vmatprep.subr.bf16.mxu0 0
    %480 = vmatpush1.bf16.msra.mxu0 0
    %481 = vmatprep.subr.bf16.mxu0 0
    %482 = vmatpush1.bf16.msra.mxu0 0
    %483 = vmatprep.subr.bf16.mxu0 0
    %484 = vmatpush1.bf16.msra.mxu0 0
    %485 = vmatprep.subr.bf16.mxu0 0
    %486 = vmatpush1.bf16.msra.mxu0 0
    %487 = vmatprep.subr.bf16.mxu0 0
    %488 = vmatpush1.bf16.msra.mxu0 0
    %489 = vmatprep.mubr.bf16.mxu0 0
    %490 = vmatmul.mubr.bf16.gmra.mrb[0].mxu0 %v385
    %v491 = vpop.f32.mrb[0].mxu0
    %v492 = vadd.f32 %v407, %v491
    %v493 = vpop.f32.mrb[0].mxu0
    %v494 = vpop.f32.mrb[0].mxu0
    %v495 = vpop.f32.mrb[0].mxu0
    %496 = vdwg.mxu0
    %497 = vst [vmem:[#allocation2] sm:$0xff] %v492
    // Predicated region
    $region58: #{output_layer.1} parent=1 // pred_check
      _
    $region59: #{output_layer.1} parent=1 // pred_check_branch
      %499 = sbr.rel (0) target = $region61
    $region60: #{output_layer.1} parent=1 // pred_region
      %s501 = ssub.s32 128, 128
      %502 = vsyncadd [#allocation3], %s501
      %s504 = sshll.u32 [#allocation2], 4
      %s505 = int_to_ptr.vmem [resolvable:$true] %s504
      %507 = dma.vmem_to_hbm [thread:$0]  %s505, 128, %s14, [#allocation3]
    $region61: #{output_layer.1} parent=1 // pred_fallthru
      _
    // Predicated region
    $region62: #{output_layer.1} parent=1 // pred_check
      _
    $region63: #{output_layer.1} parent=1 // pred_check_branch
      %509 = sbr.rel (0) target = $region65
    $region64: #{output_layer.1} parent=1 // pred_region
      %510 = dma.done [#allocation3], 128
    $region65: #{output_layer.1} parent=1 // pred_fallthru
      _
    %511 = vsyncpa [#allocation3], 1

</llo_original>
